<compile_context>
chip_gen: v5e
topology: v5e:2x2
jax: 0.10.0
libtpu: 0.0.40
codegen_flags: <defaults>
</compile_context>

<pallas_src>
import math
import functools

import jax
import jax.numpy as jnp
from jax.experimental import pallas as pl
from jax.experimental.pallas import tpu as pltpu

LN_EPS = 1e-5
NEG_INF = -1e30      # additive mask value for padded keys


def _layer_norm(x, w, b):
    mean = jnp.mean(x, axis=-1, keepdims=True)
    var = jnp.mean((x - mean) ** 2, axis=-1, keepdims=True)
    return (x - mean) * jax.lax.rsqrt(var + LN_EPS) * w + b


# ------------------------------- kernel ------------------------------------ #

def encoder_decoder_kernel(x0_ref, mask_ref,
                           w_qkv_ref, b_qkv_ref,
                           w_out_ref, b_out_ref,
                           ln1_w_ref, ln1_b_ref,
                           w_ff1_ref, b_ff1_ref,
                           w_ff2_ref, b_ff2_ref,
                           ln2_w_ref, ln2_b_ref,
                           w_dec_ref, b_dec_ref,
                           o_ref,
                           state_ref,
                           *, nhead):
    """All post-norm nn.TransformerEncoderLayer layers + fused decoder Linear
    for one batch tile.  grid = (batch_tiles, num_layers); the activation is
    resident in `state_ref` (VMEM scratch) across the inner layer axis."""
    l = pl.program_id(1)
    n_layers = pl.num_programs(1)

    Bt, S, D = state_ref.shape
    hd = D // nhead
    R = Bt * S
    BH = Bt * nhead

    # Input scaling * sqrt(d_model) + positional encoding is pre-fused in the
    # wrapper; just seed the resident state once per batch tile.
    @pl.when(l == 0)
    def _init():
        state_ref[...] = x0_ref[...]

    x2d = state_ref[...].reshape(R, D)                         # (R, D) f32

    # --- self attention -------------------------------------------------- #
    qkv = jnp.dot(x2d.astype(jnp.bfloat16), w_qkv_ref[...],
                  preferred_element_type=jnp.float32) + b_qkv_ref[...]  # (R, 3D)

    # Single relayout per layer: (R, 3D) -> (3*nhead, R, hd), heads folded
    # into a leading einsum batch dim (no per-head column slices).
    qkv = qkv.reshape(R, 3 * nhead, hd).astype(jnp.bfloat16)
    qkv_h = pltpu.einshape("mhd->hmd", qkv)                    # (3*nhead, R, hd)
    q = qkv_h[:nhead].reshape(BH, S, hd)          # 1/sqrt(hd) folded into W_q
    k = qkv_h[nhead:2 * nhead].reshape(BH, S, hd)
    v = qkv_h[2 * nhead:].reshape(BH, S, hd)

    s = jnp.einsum("bqd,bkd->bqk", q, k,
                   preferred_element_type=jnp.float32)         # (BH, S, S)
    mask = mask_ref[...]                                       # (Bt, 1, S) additive
    s4 = s.reshape(nhead, Bt, S, S) + mask[None]               # keys-only mask
    m = jnp.max(s4, axis=-1, keepdims=True)
    p = jnp.exp(s4 - m)
    p = p * pl.reciprocal(jnp.sum(p, axis=-1, keepdims=True), approx=True)

    ob = jnp.einsum("bqk,bkd->bqd",
                    p.reshape(BH, S, S).astype(jnp.bfloat16), v,
                    preferred_element_type=jnp.float32)        # (BH, S, hd)
    # (BH, S, hd) -> (R, D) in head-concat column order, then ONE K=D MXU
    # contraction for the output projection (no nhead K=hd accumulation).
    ob = pltpu.einshape("hmd->mhd",
                        ob.astype(jnp.bfloat16).reshape(nhead, R, hd))
    attn2d = jnp.dot(ob.reshape(R, D), w_out_ref[...],
                     preferred_element_type=jnp.float32) + b_out_ref[...]

    # TODO(synk): dropout omitted everywhere (eval-mode / p=0 semantics).
    x1 = _layer_norm(x2d + attn2d, ln1_w_ref[...], ln1_b_ref[...])

    # --- feed-forward ----------------------------------------------------- #
    h1 = jnp.dot(x1.astype(jnp.bfloat16), w_ff1_ref[...],
                 preferred_element_type=jnp.float32) + b_ff1_ref[...]
    h1 = jnp.maximum(h1, 0.0)                                  # relu
    h2 = jnp.dot(h1.astype(jnp.bfloat16), w_ff2_ref[...],
                 preferred_element_type=jnp.float32) + b_ff2_ref[...]
    x_new = _layer_norm(x1 + h2, ln2_w_ref[...], ln2_b_ref[...])   # (R, D)

    @pl.when(l < n_layers - 1)
    def _store():                     # skip redundant store on the last layer
        state_ref[...] = x_new.reshape(Bt, S, D)

    @pl.when(l == n_layers - 1)
    def _finalize():
        # Fused decoder Linear: avoids a (B,S,D) f32 HBM round trip.
        y = jnp.dot(x_new.astype(jnp.bfloat16), w_dec_ref[...],
                    preferred_element_type=jnp.float32) + b_dec_ref[...]
        o_ref[...] = y.reshape(Bt, S, o_ref.shape[-1])


# ------------------------------- wrappers ----------------------------------- #

def _pick_batch_tile(batch, seq, max_rows=512, min_batch_programs=2):
    """Largest divisor of batch keeping flattened rows moderate while leaving
    >= min_batch_programs programs on the parallel batch axis (v7x: 2 TCs)."""
    for bt in range(batch, 0, -1):
        if batch % bt:
            continue
        if bt * seq > max_rows:
            continue
        if bt > 1 and batch // bt < min_batch_programs:
            continue
        return bt
    return 1


def run_fused_encoder(x0, mask_add, p, *, nhead, batch_tile):
    B, S, D = x0.shape
    L = p["w_qkv_t"].shape[0]
    dff = p["w_ff1_t"].shape[-1]
    O = p["dec_w_t"].shape[-1]
    Bt = batch_tile

    def wspec(shape):
        # per-layer weight block, leading layer axis squeezed out
        return pl.BlockSpec((None,) + shape,
                            lambda bt, l: (l,) + (0,) * len(shape))

    kernel = functools.partial(encoder_decoder_kernel, nhead=nhead)
    return pl.pallas_call(
        kernel,
        out_shape=jax.ShapeDtypeStruct((B, S, O), jnp.float32),
        grid=(B // Bt, L),
        in_specs=[
            pl.BlockSpec((Bt, S, D), lambda bt, l: (bt, 0, 0)),   # x*sqrt(D)+pe
            pl.BlockSpec((Bt, 1, S), lambda bt, l: (bt, 0, 0)),   # additive mask
            wspec((D, 3 * D)), wspec((1, 3 * D)),                 # qkv proj
            wspec((D, D)), wspec((1, D)),                         # out proj
            wspec((1, D)), wspec((1, D)),                         # ln1 w, b
            wspec((D, dff)), wspec((1, dff)),                     # ff1 w, b
            wspec((dff, D)), wspec((1, D)),                       # ff2 w, b
            wspec((1, D)), wspec((1, D)),                         # ln2 w, b
            pl.BlockSpec((D, O), lambda bt, l: (0, 0)),           # decoder W
            pl.BlockSpec((1, O), lambda bt, l: (0, 0)),           # decoder b
        ],
        out_specs=pl.BlockSpec((Bt, S, O), lambda bt, l: (bt, 0, 0)),
        scratch_shapes=[pltpu.VMEM((Bt, S, D), jnp.float32)],     # resident x
        compiler_params=pltpu.CompilerParams(
            dimension_semantics=("parallel", "arbitrary"),
            vmem_limit_bytes=40 * 1024 * 1024),
    )(x0, mask_add,
      p["w_qkv_t"], p["b_qkv"], p["w_out_t"], p["b_out"],
      p["ln1_w"], p["ln1_b"],
      p["w_ff1_t"], p["b_ff1"], p["w_ff2_t"], p["b_ff2"],
      p["ln2_w"], p["ln2_b"],
      p["dec_w_t"], p["dec_b"])


def sinusoidal_pe(seq_len, d_model):
    pos = jnp.arange(seq_len, dtype=jnp.float32)[:, None]
    div = jnp.exp(jnp.arange(0, d_model, 2, dtype=jnp.float32)
                  * (-math.log(10000.0) / d_model))
    pe = jnp.zeros((seq_len, d_model), jnp.float32)
    pe = pe.at[:, 0::2].set(jnp.sin(pos * div))
    pe = pe.at[:, 1::2].set(jnp.cos(pos * div))
    return pe


def document_encoder_forward(inputs, num_nodes, params, *, nhead,
                             batch_tile=None):
    B, S, D = inputs.shape
    if batch_tile is None:
        batch_tile = _pick_batch_tile(B, S)
    # key padding mask: True for padded positions -> additive -inf-ish mask
    pad = jnp.arange(S)[None, :] >= num_nodes[:, None]              # (B, S)
    mask_add = jnp.where(pad, NEG_INF, 0.0).astype(jnp.float32)[:, None, :]
    # fuse input scaling + positional encoding in the wrapper (eval dropout).
    x0 = inputs.astype(jnp.float32) * math.sqrt(D) + sinusoidal_pe(S, D)[None]
    return run_fused_encoder(x0, mask_add, params,
                             nhead=nhead, batch_tile=batch_tile)


# ----------------------------- parameter init ------------------------------- #

def init_params(key, d_model, dff, out_dim, num_layers):
    """PyTorch-layout per-layer parameters ([out_features, in_features])."""
    def uni(k, shape, bound):
        return jax.random.uniform(k, shape, jnp.float32, -bound, bound)

    layers = []
    for l in range(num_layers):
        k = jax.random.fold_in(key, l)
        ks = jax.random.split(k, 8)
        bd = 1.0 / math.sqrt(d_model)
        bf = 1.0 / math.sqrt(dff)
        layers.append(dict(
            w_in=uni(ks[0], (3 * d_model, d_model), bd),
            b_in=uni(ks[1], (1, 3 * d_model), bd),
            w_out=uni(ks[2], (d_model, d_model), bd),
            b_out=uni(ks[3], (1, d_model), bd),
            ln1_w=jnp.ones((1, d_model), jnp.float32),
            ln1_b=jnp.zeros((1, d_model), jnp.float32),
            w_ff1=uni(ks[4], (dff, d_model), bd),
            b_ff1=uni(ks[5], (1, dff), bd),
            w_ff2=uni(ks[6], (d_model, dff), bf),
            b_ff2=uni(ks[7], (1, d_model), bf),
            ln2_w=jnp.ones((1, d_model), jnp.float32),
            ln2_b=jnp.zeros((1, d_model), jnp.float32),
        ))
    kd = jax.random.fold_in(key, 10_000)
    return dict(
        layers=layers,
        dec_w=uni(kd, (out_dim, d_model), 0.1),       # init_weights(): U(-0.1, 0.1)
        dec_b=jnp.zeros((1, out_dim), jnp.float32),   # init_weights(): zeros
    )


def pack_params(raw, nhead):
    """Stack per-layer params with a leading L axis; pre-transpose matmul
    weights to [in, out], fold 1/sqrt(head_dim) into the q in-projection, and
    cast matmul weights to bf16 (biases / LN params stay f32)."""
    L = len(raw["layers"])

    def stack(name):
        return jnp.stack([raw["layers"][l][name] for l in range(L)])

    w_in = stack("w_in")                                   # (L, 3D, D)
    b_in = stack("b_in")                                   # (L, 1, 3D)
    D = w_in.shape[-1]
    hd = D // nhead
    scale = 1.0 / math.sqrt(hd)
    qsc = jnp.concatenate([jnp.full((D,), scale, jnp.float32),
                           jnp.ones((2 * D,), jnp.float32)])
    w_in = w_in * qsc[None, :, None]                       # scale q rows
    b_in = b_in * qsc[None, None, :]

    return dict(
        w_qkv_t=jnp.transpose(w_in, (0, 2, 1)).astype(jnp.bfloat16),   # (L, D, 3D)
        b_qkv=b_in,
        w_out_t=jnp.transpose(stack("w_out"), (0, 2, 1)).astype(jnp.bfloat16),
        b_out=stack("b_out"),
        ln1_w=stack("ln1_w"), ln1_b=stack("ln1_b"),
        w_ff1_t=jnp.transpose(stack("w_ff1"), (0, 2, 1)).astype(jnp.bfloat16),
        b_ff1=stack("b_ff1"),
        w_ff2_t=jnp.transpose(stack("w_ff2"), (0, 2, 1)).astype(jnp.bfloat16),
        b_ff2=stack("b_ff2"),
        ln2_w=stack("ln2_w"), ln2_b=stack("ln2_b"),
        dec_w_t=raw["dec_w"].T.astype(jnp.bfloat16),       # (D, out_dim)
        dec_b=raw["dec_b"],
    )


# ----------------------------- pure-JAX reference ---------------------------- #
# Mirrors the kernel math (same bf16 operand casts, f32 accumulation) so the
# check isolates kernel bugs from expected bf16 rounding.

def ref_forward(inputs, num_nodes, p, *, nhead):
    B, S, D = inputs.shape
    L = p["w_qkv_t"].shape[0]
    hd = D // nhead

    pad = jnp.arange(S)[None, :] >= num_nodes[:, None]
    mask = jnp.where(pad, NEG_INF, 0.0).astype(jnp.float32)        # (B, S)
    x = inputs * math.sqrt(D) + sinusoidal_pe(S, D)[None]

    for l in range(L):
        x2d = x.reshape(B * S, D)
        qkv = jnp.dot(x2d.astype(jnp.bfloat16), p["w_qkv_t"][l],
                      preferred_element_type=jnp.float32) + p["b_qkv"][l]
        qkv = qkv.reshape(B, S, 3, nhead, hd).astype(jnp.bfloat16)
        q = jnp.transpose(qkv[:, :, 0], (0, 2, 1, 3))              # (B,H,S,hd)
        k = jnp.transpose(qkv[:, :, 1], (0, 2, 1, 3))
        v = jnp.transpose(qkv[:, :, 2], (0, 2, 1, 3))
        s = jnp.einsum("bhqd,bhkd->bhqk", q, k,
                       preferred_element_type=jnp.float32) + mask[:, None, None, :]
        a = jax.nn.softmax(s, axis=-1)
        o = jnp.einsum("bhqk,bhkd->bhqd", a.astype(jnp.bfloat16), v,
                       preferred_element_type=jnp.float32)
        o = jnp.transpose(o, (0, 2, 1, 3)).reshape(B * S, D).astype(jnp.bfloat16)
        attn = jnp.dot(o, p["w_out_t"][l],
                       preferred_element_type=jnp.float32) + p["b_out"][l]
        x1 = _layer_norm(x2d + attn, p["ln1_w"][l], p["ln1_b"][l])
        h1 = jnp.maximum(
            jnp.dot(x1.astype(jnp.bfloat16), p["w_ff1_t"][l],
                    preferred_element_type=jnp.float32) + p["b_ff1"][l], 0.0)
        h2 = jnp.dot(h1.astype(jnp.bfloat16), p["w_ff2_t"][l],
                     preferred_element_type=jnp.float32) + p["b_ff2"][l]
        x = _layer_norm(x1 + h2, p["ln2_w"][l], p["ln2_b"][l]).reshape(B, S, D)

    out = jnp.dot(x.reshape(B * S, D).astype(jnp.bfloat16), p["dec_w_t"],
                  preferred_element_type=jnp.float32) + p["dec_b"]
    return out.reshape(B, S, -1)


# ---------------------------------- main ------------------------------------ #

if __name__ == "__main__":
    # Small config consistent with the module (in_dim=out_dim=d_model, nhead=4).
    B, S = 2, 8
    D_MODEL, OUT_DIM, DFF = 32, 32, 64
    NHEAD, NUM_LAYERS = 4, 2

    key = jax.random.PRNGKey(0)
    k_in, k_par = jax.random.split(key)
    inputs = jax.random.normal(k_in, (B, S, D_MODEL), jnp.float32)
    num_nodes = jnp.array([5, 8], dtype=jnp.int32)
    params = pack_params(init_params(k_par, D_MODEL, DFF, OUT_DIM, NUM_LAYERS),
                         NHEAD)

    out = jax.block_until_ready(
        document_encoder_forward(inputs, num_nodes, params, nhead=NHEAD))
    ref = jax.block_until_ready(
        ref_forward(inputs, num_nodes, params, nhead=NHEAD))

    assert out.shape == (B, S, OUT_DIM), out.shape
    err = float(jnp.max(jnp.abs(out - ref)))
    assert err < 3e-2, err   # bf16 matmuls + approx softmax reciprocal
    print("KERNEL_OK")
</pallas_src>

<mosaic_0001>
module attributes {stable_mosaic.version = 11 : i64} {
  func.func @encoder_decoder_kernel(%arg0: i32, %arg1: i32, %arg2: memref<1x8x32xf32, #tpu.memory_space<vmem>>, %arg3: memref<1x1x8xf32, #tpu.memory_space<vmem>>, %arg4: memref<1x32x96xbf16, #tpu.memory_space<vmem>>, %arg5: memref<1x1x96xf32, #tpu.memory_space<vmem>>, %arg6: memref<1x32x32xbf16, #tpu.memory_space<vmem>>, %arg7: memref<1x1x32xf32, #tpu.memory_space<vmem>>, %arg8: memref<1x1x32xf32, #tpu.memory_space<vmem>>, %arg9: memref<1x1x32xf32, #tpu.memory_space<vmem>>, %arg10: memref<1x32x64xbf16, #tpu.memory_space<vmem>>, %arg11: memref<1x1x64xf32, #tpu.memory_space<vmem>>, %arg12: memref<1x64x32xbf16, #tpu.memory_space<vmem>>, %arg13: memref<1x1x32xf32, #tpu.memory_space<vmem>>, %arg14: memref<1x1x32xf32, #tpu.memory_space<vmem>>, %arg15: memref<1x1x32xf32, #tpu.memory_space<vmem>>, %arg16: memref<32x32xbf16, #tpu.memory_space<vmem>>, %arg17: memref<1x32xf32, #tpu.memory_space<vmem>>, %arg18: memref<1x8x32xf32, #tpu.memory_space<vmem>>, %arg19: memref<1x8x32xf32, #tpu.memory_space<vmem>>) attributes {dimension_semantics = [#tpu.dimension_semantics<parallel>, #tpu.dimension_semantics<arbitrary>], iteration_bounds = array<i64: 2, 2>, scalar_prefetch = 0 : i64, scratch_operands = 1 : i64, tpu.core_type = #tpu.core_type<tc>, window_params = [{transform_indices = @transform_0, window_bounds = array<i64: 1, 8, 32>}, {transform_indices = @transform_1, window_bounds = array<i64: 1, 1, 8>}, {transform_indices = @transform_2, window_bounds = array<i64: 1, 32, 96>}, {transform_indices = @transform_3, window_bounds = array<i64: 1, 1, 96>}, {transform_indices = @transform_4, window_bounds = array<i64: 1, 32, 32>}, {transform_indices = @transform_5, window_bounds = array<i64: 1, 1, 32>}, {transform_indices = @transform_6, window_bounds = array<i64: 1, 1, 32>}, {transform_indices = @transform_7, window_bounds = array<i64: 1, 1, 32>}, {transform_indices = @transform_8, window_bounds = array<i64: 1, 32, 64>}, {transform_indices = @transform_9, window_bounds = array<i64: 1, 1, 64>}, {transform_indices = @transform_10, window_bounds = array<i64: 1, 64, 32>}, {transform_indices = @transform_11, window_bounds = array<i64: 1, 1, 32>}, {transform_indices = @transform_12, window_bounds = array<i64: 1, 1, 32>}, {transform_indices = @transform_13, window_bounds = array<i64: 1, 1, 32>}, {pipeline_mode = #tpu.pipeline_mode<synchronous>, transform_indices = @transform_14, window_bounds = array<i64: 32, 32>}, {pipeline_mode = #tpu.pipeline_mode<synchronous>, transform_indices = @transform_15, window_bounds = array<i64: 1, 32>}, {transform_indices = @transform_16, window_bounds = array<i64: 1, 8, 32>}]} {
    %c0_i32 = arith.constant 0 : i32
    %0 = arith.cmpi eq, %arg1, %c0_i32 : i32
    %1 = arith.extui %0 : i1 to i32
    %c0_i32_0 = arith.constant 0 : i32
    %2 = arith.cmpi ne, %1, %c0_i32_0 : i32
    scf.if %2 {
      %c0_63 = arith.constant 0 : index
      %c0_64 = arith.constant 0 : index
      %c0_65 = arith.constant 0 : index
      %126 = vector.load %arg2[%c0_63, %c0_64, %c0_65] : memref<1x8x32xf32, #tpu.memory_space<vmem>>, vector<1x8x32xf32>
      %c0_66 = arith.constant 0 : index
      %c0_67 = arith.constant 0 : index
      %c0_68 = arith.constant 0 : index
      %127 = vector.load %arg19[%c0_66, %c0_67, %c0_68] : memref<1x8x32xf32, #tpu.memory_space<vmem>>, vector<1x8x32xf32>
      tpu.vector_store %arg19[%c0_66, %c0_67, %c0_68], %126 {strides = array<i32>} : memref<1x8x32xf32, #tpu.memory_space<vmem>>, vector<1x8x32xf32>,
    } else {
    }
    %c0 = arith.constant 0 : index
    %c0_1 = arith.constant 0 : index
    %c0_2 = arith.constant 0 : index
    %3 = vector.load %arg19[%c0, %c0_1, %c0_2] : memref<1x8x32xf32, #tpu.memory_space<vmem>>, vector<1x8x32xf32>
    %4 = vector.shape_cast %3 : vector<1x8x32xf32> to vector<8x32xf32>
    %5 = arith.truncf %4 : vector<8x32xf32> to vector<8x32xbf16>
    %c0_3 = arith.constant 0 : index
    %c0_4 = arith.constant 0 : index
    %c0_5 = arith.constant 0 : index
    %6 = vector.load %arg4[%c0_3, %c0_4, %c0_5] : memref<1x32x96xbf16, #tpu.memory_space<vmem>>, vector<1x32x96xbf16>
    %7 = vector.shape_cast %6 : vector<1x32x96xbf16> to vector<32x96xbf16>
    %cst = arith.constant dense<0.000000e+00> : vector<8x96xf32>
    %8 = tpu.matmul %5, %7, %cst {dimension_numbers = #tpu.dot_dimension_numbers<[1], [0], [0], [1], [0, 0, 1, 1], [], []>} : vector<8x32xbf16>, vector<32x96xbf16>, vector<8x96xf32> -> vector<8x96xf32>
    %c0_6 = arith.constant 0 : index
    %c0_7 = arith.constant 0 : index
    %c0_8 = arith.constant 0 : index
    %9 = vector.load %arg5[%c0_6, %c0_7, %c0_8] : memref<1x1x96xf32, #tpu.memory_space<vmem>>, vector<1x1x96xf32>
    %10 = vector.shape_cast %9 : vector<1x1x96xf32> to vector<1x96xf32>
    %11 = vector.broadcast %10 : vector<1x96xf32> to vector<8x96xf32>
    %12 = arith.addf %8, %11 : vector<8x96xf32>
    %13 = vector.shape_cast %12 : vector<8x96xf32> to vector<8x12x8xf32>
    %14 = arith.truncf %13 : vector<8x12x8xf32> to vector<8x12x8xbf16>
    %15 = tpu.transpose %14, [1, 0, 2] : vector<8x12x8xbf16> -> vector<12x8x8xbf16>
    %16 = vector.extract_strided_slice %15 {offsets = [0, 0, 0], sizes = [4, 8, 8], strides = [1, 1, 1]} : vector<12x8x8xbf16> to vector<4x8x8xbf16>
    %17 = vector.extract_strided_slice %15 {offsets = [4, 0, 0], sizes = [4, 8, 8], strides = [1, 1, 1]} : vector<12x8x8xbf16> to vector<4x8x8xbf16>
    %18 = vector.extract_strided_slice %15 {offsets = [8, 0, 0], sizes = [4, 8, 8], strides = [1, 1, 1]} : vector<12x8x8xbf16> to vector<4x8x8xbf16>
    "tpu.trace_start"() <{level = 10 : i32, message = "bqd,bkd->bqk"}> : () -> ()
    %cst_9 = arith.constant dense<0.000000e+00> : vector<4x8x8xf32>
    %19 = tpu.matmul %16, %17, %cst_9 {dimension_numbers = #tpu.dot_dimension_numbers<[2], [2], [1], [1], [0, 0, 0, 1, 1, 1], [0], [0]>} : vector<4x8x8xbf16>, vector<4x8x8xbf16>, vector<4x8x8xf32> -> vector<4x8x8xf32>
    "tpu.trace_stop"() : () -> ()
    %c0_10 = arith.constant 0 : index
    %c0_11 = arith.constant 0 : index
    %c0_12 = arith.constant 0 : index
    %20 = vector.load %arg3[%c0_10, %c0_11, %c0_12] : memref<1x1x8xf32, #tpu.memory_space<vmem>>, vector<1x1x8xf32>
    %21 = vector.shape_cast %19 : vector<4x8x8xf32> to vector<4x1x8x8xf32>
    %22 = vector.shape_cast %20 : vector<1x1x8xf32> to vector<1x1x1x8xf32>
    %23 = vector.broadcast %22 : vector<1x1x1x8xf32> to vector<4x1x8x8xf32>
    %24 = arith.addf %21, %23 : vector<4x1x8x8xf32>
    %cst_13 = arith.constant dense<0xFF800000> : vector<4x1x8xf32>
    %25 = vector.multi_reduction <maximumf>, %24, %cst_13 [3] : vector<4x1x8x8xf32> to vector<4x1x8xf32>
    %26 = vector.shape_cast %25 : vector<4x1x8xf32> to vector<4x1x8x1xf32>
    %27 = vector.broadcast %26 : vector<4x1x8x1xf32> to vector<4x1x8x8xf32>
    %28 = arith.subf %24, %27 : vector<4x1x8x8xf32>
    %29 = math.exp %28 : vector<4x1x8x8xf32>
    %cst_14 = arith.constant dense<0.000000e+00> : vector<4x1x8xf32>
    %30 = vector.multi_reduction <add>, %29, %cst_14 [3] : vector<4x1x8x8xf32> to vector<4x1x8xf32>
    %31 = vector.shape_cast %30 : vector<4x1x8xf32> to vector<4x1x8x1xf32>
    %32 = tpu.reciprocal %31 {approx = true} : vector<4x1x8x1xf32> -> vector<4x1x8x1xf32>
    %33 = vector.broadcast %32 : vector<4x1x8x1xf32> to vector<4x1x8x8xf32>
    %34 = arith.mulf %29, %33 : vector<4x1x8x8xf32>
    %35 = vector.shape_cast %34 : vector<4x1x8x8xf32> to vector<4x8x8xf32>
    %36 = arith.truncf %35 : vector<4x8x8xf32> to vector<4x8x8xbf16>
    "tpu.trace_start"() <{level = 10 : i32, message = "bqk,bkd->bqd"}> : () -> ()
    %cst_15 = arith.constant dense<0.000000e+00> : vector<4x8x8xf32>
    %37 = tpu.matmul %36, %18, %cst_15 {dimension_numbers = #tpu.dot_dimension_numbers<[2], [1], [1], [2], [0, 0, 0, 1, 1, 2], [0], [0]>} : vector<4x8x8xbf16>, vector<4x8x8xbf16>, vector<4x8x8xf32> -> vector<4x8x8xf32>
    "tpu.trace_stop"() : () -> ()
    %38 = arith.truncf %37 : vector<4x8x8xf32> to vector<4x8x8xbf16>
    %39 = tpu.transpose %38, [1, 0, 2] : vector<4x8x8xbf16> -> vector<8x4x8xbf16>
    %40 = vector.shape_cast %39 : vector<8x4x8xbf16> to vector<8x32xbf16>
    %c0_16 = arith.constant 0 : index
    %c0_17 = arith.constant 0 : index
    %c0_18 = arith.constant 0 : index
    %41 = vector.load %arg6[%c0_16, %c0_17, %c0_18] : memref<1x32x32xbf16, #tpu.memory_space<vmem>>, vector<1x32x32xbf16>
    %42 = vector.shape_cast %41 : vector<1x32x32xbf16> to vector<32x32xbf16>
    %cst_19 = arith.constant dense<0.000000e+00> : vector<8x32xf32>
    %43 = tpu.matmul %40, %42, %cst_19 {dimension_numbers = #tpu.dot_dimension_numbers<[1], [0], [0], [1], [0, 0, 1, 1], [], []>} : vector<8x32xbf16>, vector<32x32xbf16>, vector<8x32xf32> -> vector<8x32xf32>
    %c0_20 = arith.constant 0 : index
    %c0_21 = arith.constant 0 : index
    %c0_22 = arith.constant 0 : index
    %44 = vector.load %arg7[%c0_20, %c0_21, %c0_22] : memref<1x1x32xf32, #tpu.memory_space<vmem>>, vector<1x1x32xf32>
    %45 = vector.shape_cast %44 : vector<1x1x32xf32> to vector<1x32xf32>
    %46 = vector.broadcast %45 : vector<1x32xf32> to vector<8x32xf32>
    %47 = arith.addf %43, %46 : vector<8x32xf32>
    %48 = arith.addf %4, %47 : vector<8x32xf32>
    %c0_23 = arith.constant 0 : index
    %c0_24 = arith.constant 0 : index
    %c0_25 = arith.constant 0 : index
    %49 = vector.load %arg8[%c0_23, %c0_24, %c0_25] : memref<1x1x32xf32, #tpu.memory_space<vmem>>, vector<1x1x32xf32>
    %50 = vector.shape_cast %49 : vector<1x1x32xf32> to vector<1x32xf32>
    %c0_26 = arith.constant 0 : index
    %c0_27 = arith.constant 0 : index
    %c0_28 = arith.constant 0 : index
    %51 = vector.load %arg9[%c0_26, %c0_27, %c0_28] : memref<1x1x32xf32, #tpu.memory_space<vmem>>, vector<1x1x32xf32>
    %52 = vector.shape_cast %51 : vector<1x1x32xf32> to vector<1x32xf32>
    %cst_29 = arith.constant dense<0.000000e+00> : vector<8xf32>
    %53 = vector.multi_reduction <add>, %48, %cst_29 [1] : vector<8x32xf32> to vector<8xf32>
    %54 = vector.shape_cast %53 : vector<8xf32> to vector<8x1xf32>
    %cst_30 = arith.constant 3.200000e+01 : f32
    %55 = vector.broadcast %cst_30 : f32 to vector<8x1xf32>
    %56 = arith.divf %54, %55 : vector<8x1xf32>
    %57 = vector.broadcast %56 : vector<8x1xf32> to vector<8x32xf32>
    %58 = arith.subf %48, %57 : vector<8x32xf32>
    %59 = arith.mulf %58, %58 : vector<8x32xf32>
    %cst_31 = arith.constant dense<0.000000e+00> : vector<8xf32>
    %60 = vector.multi_reduction <add>, %59, %cst_31 [1] : vector<8x32xf32> to vector<8xf32>
    %61 = vector.shape_cast %60 : vector<8xf32> to vector<8x1xf32>
    %cst_32 = arith.constant 3.200000e+01 : f32
    %62 = vector.broadcast %cst_32 : f32 to vector<8x1xf32>
    %63 = arith.divf %61, %62 : vector<8x1xf32>
    %64 = vector.broadcast %56 : vector<8x1xf32> to vector<8x32xf32>
    %65 = arith.subf %48, %64 : vector<8x32xf32>
    %cst_33 = arith.constant 9.99999974E-6 : f32
    %66 = vector.broadcast %cst_33 : f32 to vector<8x1xf32>
    %67 = arith.addf %63, %66 : vector<8x1xf32>
    %68 = math.rsqrt %67 : vector<8x1xf32>
    %69 = vector.broadcast %68 : vector<8x1xf32> to vector<8x32xf32>
    %70 = arith.mulf %65, %69 : vector<8x32xf32>
    %71 = vector.broadcast %50 : vector<1x32xf32> to vector<8x32xf32>
    %72 = arith.mulf %70, %71 : vector<8x32xf32>
    %73 = vector.broadcast %52 : vector<1x32xf32> to vector<8x32xf32>
    %74 = arith.addf %72, %73 : vector<8x32xf32>
    %75 = arith.truncf %74 : vector<8x32xf32> to vector<8x32xbf16>
    %c0_34 = arith.constant 0 : index
    %c0_35 = arith.constant 0 : index
    %c0_36 = arith.constant 0 : index
    %76 = vector.load %arg10[%c0_34, %c0_35, %c0_36] : memref<1x32x64xbf16, #tpu.memory_space<vmem>>, vector<1x32x64xbf16>
    %77 = vector.shape_cast %76 : vector<1x32x64xbf16> to vector<32x64xbf16>
    %cst_37 = arith.constant dense<0.000000e+00> : vector<8x64xf32>
    %78 = tpu.matmul %75, %77, %cst_37 {dimension_numbers = #tpu.dot_dimension_numbers<[1], [0], [0], [1], [0, 0, 1, 1], [], []>} : vector<8x32xbf16>, vector<32x64xbf16>, vector<8x64xf32> -> vector<8x64xf32>
    %c0_38 = arith.constant 0 : index
    %c0_39 = arith.constant 0 : index
    %c0_40 = arith.constant 0 : index
    %79 = vector.load %arg11[%c0_38, %c0_39, %c0_40] : memref<1x1x64xf32, #tpu.memory_space<vmem>>, vector<1x1x64xf32>
    %80 = vector.shape_cast %79 : vector<1x1x64xf32> to vector<1x64xf32>
    %81 = vector.broadcast %80 : vector<1x64xf32> to vector<8x64xf32>
    %82 = arith.addf %78, %81 : vector<8x64xf32>
    %cst_41 = arith.constant 0.000000e+00 : f32
    %83 = vector.broadcast %cst_41 : f32 to vector<8x64xf32>
    %84 = arith.maximumf %82, %83 : vector<8x64xf32>
    %85 = arith.truncf %84 : vector<8x64xf32> to vector<8x64xbf16>
    %c0_42 = arith.constant 0 : index
    %c0_43 = arith.constant 0 : index
    %c0_44 = arith.constant 0 : index
    %86 = vector.load %arg12[%c0_42, %c0_43, %c0_44] : memref<1x64x32xbf16, #tpu.memory_space<vmem>>, vector<1x64x32xbf16>
    %87 = vector.shape_cast %86 : vector<1x64x32xbf16> to vector<64x32xbf16>
    %cst_45 = arith.constant dense<0.000000e+00> : vector<8x32xf32>
    %88 = tpu.matmul %85, %87, %cst_45 {dimension_numbers = #tpu.dot_dimension_numbers<[1], [0], [0], [1], [0, 0, 1, 1], [], []>} : vector<8x64xbf16>, vector<64x32xbf16>, vector<8x32xf32> -> vector<8x32xf32>
    %c0_46 = arith.constant 0 : index
    %c0_47 = arith.constant 0 : index
    %c0_48 = arith.constant 0 : index
    %89 = vector.load %arg13[%c0_46, %c0_47, %c0_48] : memref<1x1x32xf32, #tpu.memory_space<vmem>>, vector<1x1x32xf32>
    %90 = vector.shape_cast %89 : vector<1x1x32xf32> to vector<1x32xf32>
    %91 = vector.broadcast %90 : vector<1x32xf32> to vector<8x32xf32>
    %92 = arith.addf %88, %91 : vector<8x32xf32>
    %93 = arith.addf %74, %92 : vector<8x32xf32>
    %c0_49 = arith.constant 0 : index
    %c0_50 = arith.constant 0 : index
    %c0_51 = arith.constant 0 : index
    %94 = vector.load %arg14[%c0_49, %c0_50, %c0_51] : memref<1x1x32xf32, #tpu.memory_space<vmem>>, vector<1x1x32xf32>
    %95 = vector.shape_cast %94 : vector<1x1x32xf32> to vector<1x32xf32>
    %c0_52 = arith.constant 0 : index
    %c0_53 = arith.constant 0 : index
    %c0_54 = arith.constant 0 : index
    %96 = vector.load %arg15[%c0_52, %c0_53, %c0_54] : memref<1x1x32xf32, #tpu.memory_space<vmem>>, vector<1x1x32xf32>
    %97 = vector.shape_cast %96 : vector<1x1x32xf32> to vector<1x32xf32>
    %cst_55 = arith.constant dense<0.000000e+00> : vector<8xf32>
    %98 = vector.multi_reduction <add>, %93, %cst_55 [1] : vector<8x32xf32> to vector<8xf32>
    %99 = vector.shape_cast %98 : vector<8xf32> to vector<8x1xf32>
    %cst_56 = arith.constant 3.200000e+01 : f32
    %100 = vector.broadcast %cst_56 : f32 to vector<8x1xf32>
    %101 = arith.divf %99, %100 : vector<8x1xf32>
    %102 = vector.broadcast %101 : vector<8x1xf32> to vector<8x32xf32>
    %103 = arith.subf %93, %102 : vector<8x32xf32>
    %104 = arith.mulf %103, %103 : vector<8x32xf32>
    %cst_57 = arith.constant dense<0.000000e+00> : vector<8xf32>
    %105 = vector.multi_reduction <add>, %104, %cst_57 [1] : vector<8x32xf32> to vector<8xf32>
    %106 = vector.shape_cast %105 : vector<8xf32> to vector<8x1xf32>
    %cst_58 = arith.constant 3.200000e+01 : f32
    %107 = vector.broadcast %cst_58 : f32 to vector<8x1xf32>
    %108 = arith.divf %106, %107 : vector<8x1xf32>
    %109 = vector.broadcast %101 : vector<8x1xf32> to vector<8x32xf32>
    %110 = arith.subf %93, %109 : vector<8x32xf32>
    %cst_59 = arith.constant 9.99999974E-6 : f32
    %111 = vector.broadcast %cst_59 : f32 to vector<8x1xf32>
    %112 = arith.addf %108, %111 : vector<8x1xf32>
    %113 = math.rsqrt %112 : vector<8x1xf32>
    %114 = vector.broadcast %113 : vector<8x1xf32> to vector<8x32xf32>
    %115 = arith.mulf %110, %114 : vector<8x32xf32>
    %116 = vector.broadcast %95 : vector<1x32xf32> to vector<8x32xf32>
    %117 = arith.mulf %115, %116 : vector<8x32xf32>
    %118 = vector.broadcast %97 : vector<1x32xf32> to vector<8x32xf32>
    %119 = arith.addf %117, %118 : vector<8x32xf32>
    %c1_i32 = arith.constant 1 : i32
    %120 = arith.cmpi slt, %arg1, %c1_i32 : i32
    %121 = arith.extui %120 : i1 to i32
    %c0_i32_60 = arith.constant 0 : i32
    %122 = arith.cmpi ne, %121, %c0_i32_60 : i32
    scf.if %122 {
      %126 = vector.shape_cast %119 : vector<8x32xf32> to vector<1x8x32xf32>
      %c0_63 = arith.constant 0 : index
      %c0_64 = arith.constant 0 : index
      %c0_65 = arith.constant 0 : index
      %127 = vector.load %arg19[%c0_63, %c0_64, %c0_65] : memref<1x8x32xf32, #tpu.memory_space<vmem>>, vector<1x8x32xf32>
      tpu.vector_store %arg19[%c0_63, %c0_64, %c0_65], %126 {strides = array<i32>} : memref<1x8x32xf32, #tpu.memory_space<vmem>>, vector<1x8x32xf32>,
    } else {
    }
    %c1_i32_61 = arith.constant 1 : i32
    %123 = arith.cmpi eq, %arg1, %c1_i32_61 : i32
    %124 = arith.extui %123 : i1 to i32
    %c0_i32_62 = arith.constant 0 : i32
    %125 = arith.cmpi ne, %124, %c0_i32_62 : i32
    scf.if %125 {
      %126 = arith.truncf %119 : vector<8x32xf32> to vector<8x32xbf16>
      %c0_63 = arith.constant 0 : index
      %c0_64 = arith.constant 0 : index
      %127 = vector.load %arg16[%c0_63, %c0_64] : memref<32x32xbf16, #tpu.memory_space<vmem>>, vector<32x32xbf16>
      %cst_65 = arith.constant dense<0.000000e+00> : vector<8x32xf32>
      %128 = tpu.matmul %126, %127, %cst_65 {dimension_numbers = #tpu.dot_dimension_numbers<[1], [0], [0], [1], [0, 0, 1, 1], [], []>} : vector<8x32xbf16>, vector<32x32xbf16>, vector<8x32xf32> -> vector<8x32xf32>
      %c0_66 = arith.constant 0 : index
      %c0_67 = arith.constant 0 : index
      %129 = vector.load %arg17[%c0_66, %c0_67] : memref<1x32xf32, #tpu.memory_space<vmem>>, vector<1x32xf32>
      %130 = vector.broadcast %129 : vector<1x32xf32> to vector<8x32xf32>
      %131 = arith.addf %128, %130 : vector<8x32xf32>
      %132 = vector.shape_cast %131 : vector<8x32xf32> to vector<1x8x32xf32>
      %c0_68 = arith.constant 0 : index
      %c0_69 = arith.constant 0 : index
      %c0_70 = arith.constant 0 : index
      %133 = vector.load %arg18[%c0_68, %c0_69, %c0_70] : memref<1x8x32xf32, #tpu.memory_space<vmem>>, vector<1x8x32xf32>
      tpu.vector_store %arg18[%c0_68, %c0_69, %c0_70], %132 {strides = array<i32>} : memref<1x8x32xf32, #tpu.memory_space<vmem>>, vector<1x8x32xf32>,
    } else {
    }
    return
  }
  func.func @transform_0(%arg0: i32, %arg1: i32) -> (i32, i32, i32) {
    %c0_i32 = arith.constant 0 : i32
    %c0_i32_0 = arith.constant 0 : i32
    %c0_i32_1 = arith.constant 0 : i32
    return %arg0, %c0_i32, %c0_i32_0 : i32, i32, i32
  }
  func.func @transform_1(%arg0: i32, %arg1: i32) -> (i32, i32, i32) {
    %c0_i32 = arith.constant 0 : i32
    %c0_i32_0 = arith.constant 0 : i32
    %c0_i32_1 = arith.constant 0 : i32
    return %arg0, %c0_i32, %c0_i32_0 : i32, i32, i32
  }
  func.func @transform_2(%arg0: i32, %arg1: i32) -> (i32, i32, i32) {
    %c0_i32 = arith.constant 0 : i32
    %c0_i32_0 = arith.constant 0 : i32
    %c0_i32_1 = arith.constant 0 : i32
    return %arg1, %c0_i32, %c0_i32_0 : i32, i32, i32
  }
  func.func @transform_3(%arg0: i32, %arg1: i32) -> (i32, i32, i32) {
    %c0_i32 = arith.constant 0 : i32
    %c0_i32_0 = arith.constant 0 : i32
    %c0_i32_1 = arith.constant 0 : i32
    return %arg1, %c0_i32, %c0_i32_0 : i32, i32, i32
  }
  func.func @transform_4(%arg0: i32, %arg1: i32) -> (i32, i32, i32) {
    %c0_i32 = arith.constant 0 : i32
    %c0_i32_0 = arith.constant 0 : i32
    %c0_i32_1 = arith.constant 0 : i32
    return %arg1, %c0_i32, %c0_i32_0 : i32, i32, i32
  }
  func.func @transform_5(%arg0: i32, %arg1: i32) -> (i32, i32, i32) {
    %c0_i32 = arith.constant 0 : i32
    %c0_i32_0 = arith.constant 0 : i32
    %c0_i32_1 = arith.constant 0 : i32
    return %arg1, %c0_i32, %c0_i32_0 : i32, i32, i32
  }
  func.func @transform_6(%arg0: i32, %arg1: i32) -> (i32, i32, i32) {
    %c0_i32 = arith.constant 0 : i32
    %c0_i32_0 = arith.constant 0 : i32
    %c0_i32_1 = arith.constant 0 : i32
    return %arg1, %c0_i32, %c0_i32_0 : i32, i32, i32
  }
  func.func @transform_7(%arg0: i32, %arg1: i32) -> (i32, i32, i32) {
    %c0_i32 = arith.constant 0 : i32
    %c0_i32_0 = arith.constant 0 : i32
    %c0_i32_1 = arith.constant 0 : i32
    return %arg1, %c0_i32, %c0_i32_0 : i32, i32, i32
  }
  func.func @transform_8(%arg0: i32, %arg1: i32) -> (i32, i32, i32) {
    %c0_i32 = arith.constant 0 : i32
    %c0_i32_0 = arith.constant 0 : i32
    %c0_i32_1 = arith.constant 0 : i32
    return %arg1, %c0_i32, %c0_i32_0 : i32, i32, i32
  }
  func.func @transform_9(%arg0: i32, %arg1: i32) -> (i32, i32, i32) {
    %c0_i32 = arith.constant 0 : i32
    %c0_i32_0 = arith.constant 0 : i32
    %c0_i32_1 = arith.constant 0 : i32
    return %arg1, %c0_i32, %c0_i32_0 : i32, i32, i32
  }
  func.func @transform_10(%arg0: i32, %arg1: i32) -> (i32, i32, i32) {
    %c0_i32 = arith.constant 0 : i32
    %c0_i32_0 = arith.constant 0 : i32
    %c0_i32_1 = arith.constant 0 : i32
    return %arg1, %c0_i32, %c0_i32_0 : i32, i32, i32
  }
  func.func @transform_11(%arg0: i32, %arg1: i32) -> (i32, i32, i32) {
    %c0_i32 = arith.constant 0 : i32
    %c0_i32_0 = arith.constant 0 : i32
    %c0_i32_1 = arith.constant 0 : i32
    return %arg1, %c0_i32, %c0_i32_0 : i32, i32, i32
  }
  func.func @transform_12(%arg0: i32, %arg1: i32) -> (i32, i32, i32) {
    %c0_i32 = arith.constant 0 : i32
    %c0_i32_0 = arith.constant 0 : i32
    %c0_i32_1 = arith.constant 0 : i32
    return %arg1, %c0_i32, %c0_i32_0 : i32, i32, i32
  }
  func.func @transform_13(%arg0: i32, %arg1: i32) -> (i32, i32, i32) {
    %c0_i32 = arith.constant 0 : i32
    %c0_i32_0 = arith.constant 0 : i32
    %c0_i32_1 = arith.constant 0 : i32
    return %arg1, %c0_i32, %c0_i32_0 : i32, i32, i32
  }
  func.func @transform_14(%arg0: i32, %arg1: i32) -> (i32, i32) {
    %c0_i32 = arith.constant 0 : i32
    %c0_i32_0 = arith.constant 0 : i32
    %c0_i32_1 = arith.constant 0 : i32
    return %c0_i32, %c0_i32_0 : i32, i32
  }
  func.func @transform_15(%arg0: i32, %arg1: i32) -> (i32, i32) {
    %c0_i32 = arith.constant 0 : i32
    %c0_i32_0 = arith.constant 0 : i32
    %c0_i32_1 = arith.constant 0 : i32
    return %c0_i32, %c0_i32_0 : i32, i32
  }
  func.func @transform_16(%arg0: i32, %arg1: i32) -> (i32, i32, i32) {
    %c0_i32 = arith.constant 0 : i32
    %c0_i32_0 = arith.constant 0 : i32
    %c0_i32_1 = arith.constant 0 : i32
    return %arg0, %c0_i32, %c0_i32_0 : i32, i32, i32
  }
}

</mosaic_0001>

<llo_original>
// kernel: tpu_custom_call.1
$region0: #{tpu_custom_call.1}
  #allocation0 [shape = 'u32[]', space=smem, size = 0x4, offset = 0x4, fixed_abs, tag = 'smem constant byte address 0x4 - core index']
  #allocation1 [shape = 'u32[72,128]{1,0:T(1,128)}', space=vmem, size = 0x9000, scoped, tag = 'internal scratch']
  #allocation2 [shape = 'f32[1,8,32]{2,1,0:T(8,128)}', space=vmem, size = 0x1000, scoped, tag = 'scratch operand']
  %s0 = inlined_call_operand.hbm [shape: f32[2,8,32], index: 0, kind: input, shape index: {}]
  %s1 = inlined_call_operand.hbm [shape: f32[2,1,8], index: 1, kind: input, shape index: {}]
  %s2 = inlined_call_operand.vmem [shape: bf16[2,32,96], index: 2, kind: input, shape index: {}]
  %s3 = inlined_call_operand.hbm [shape: f32[2,1,96], index: 3, kind: input, shape index: {}]
  %s4 = inlined_call_operand.vmem [shape: bf16[2,32,32], index: 4, kind: input, shape index: {}]
  %s5 = inlined_call_operand.vmem [shape: f32[2,1,32], index: 5, kind: input, shape index: {}]
  %s6 = inlined_call_operand.vmem [shape: f32[2,1,32], index: 6, kind: input, shape index: {}]
  %s7 = inlined_call_operand.hbm [shape: f32[2,1,32], index: 7, kind: input, shape index: {}]
  %s8 = inlined_call_operand.vmem [shape: bf16[2,32,64], index: 8, kind: input, shape index: {}]
  %s9 = inlined_call_operand.vmem [shape: f32[2,1,64], index: 9, kind: input, shape index: {}]
  %s10 = inlined_call_operand.vmem [shape: bf16[2,64,32], index: 10, kind: input, shape index: {}]
  %s11 = inlined_call_operand.vmem [shape: f32[2,1,32], index: 11, kind: input, shape index: {}]
  %s12 = inlined_call_operand.vmem [shape: f32[2,1,32], index: 12, kind: input, shape index: {}]
  %s13 = inlined_call_operand.hbm [shape: f32[2,1,32], index: 13, kind: input, shape index: {}]
  %s14 = inlined_call_operand.hbm [shape: bf16[32,32], index: 14, kind: input, shape index: {}]
  %s15 = inlined_call_operand.vmem [shape: f32[1,32], index: 15, kind: input, shape index: {}]
  %s16 = inlined_call_operand.hbm [shape: f32[2,8,32], index: 16, kind: output, shape index: {}]
  %s17 = sld [smem:[#allocation0]]
  $region133: #{tpu_custom_call.1} parent=0
    _
  %s19 = ssub.s32 1, %s17
  %s20 = scalar_select 0, %s19, %s17
  $region1: #{tpu_custom_call.1} parent=0
    #allocation3 [shape = 'u8[8192]{0}', space=vmem, size = 0x2000, scoped, tag = 'input window, operand 0']
    #allocation4 [shape = 's32[2]{0}', space=sflag, size = 0x8, scoped, tag = 'scoped memory for tpu_custom_call.1']
    #allocation5 [shape = 's32[2]{0}', space=sflag, size = 0x8, scoped, tag = 'scoped memory for tpu_custom_call.1']
    #allocation6 [shape = 'u8[1024]{0}', space=vmem, size = 0x400, scoped, tag = 'input window, operand 1']
    #allocation7 [shape = 's32[2]{0}', space=sflag, size = 0x8, scoped, tag = 'scoped memory for tpu_custom_call.1']
    #allocation8 [shape = 'u8[1024]{0}', space=vmem, size = 0x400, scoped, tag = 'input window, operand 3']
    #allocation9 [shape = 'u8[1024]{0}', space=vmem, size = 0x400, scoped, tag = 'input window, operand 7']
    #allocation10 [shape = 's32[2]{0}', space=sflag, size = 0x8, scoped, tag = 'scoped memory for tpu_custom_call.1']
    #allocation11 [shape = 'u8[1024]{0}', space=vmem, size = 0x400, scoped, tag = 'input window, operand 13']
    #allocation12 [shape = 'u8[8192]{0}', space=vmem, size = 0x2000, scoped, tag = 'input window, operand 14, single buffered']
    #allocation13 [shape = 's32[1]{0}', space=sflag, size = 0x4, scoped, tag = 'scoped memory for tpu_custom_call.1']
    #allocation14 [shape = 'u8[8192]{0}', space=vmem, size = 0x2000, scoped, tag = 'output window, operand 0']
    %21 = vsyncpa [#allocation4], 0
    %s22 = scalar_lea.sflag [#allocation4], 1
    %23 = vsyncpa %s22, 0
    %24 = vsyncpa [#allocation7], 0
    %s25 = scalar_lea.sflag [#allocation7], 1
    %26 = vsyncpa %s25, 0
    %27 = vsyncpa [#allocation10], 0
    %s28 = scalar_lea.sflag [#allocation10], 1
    %29 = vsyncpa %s28, 0
    %30 = vsyncpa [#allocation13], 0
    %31 = vsyncpa [#allocation5], 0
    %s32 = scalar_lea.sflag [#allocation5], 1
    %33 = vsyncpa %s32, 0
    loop: start=0, step=1, limit=6
    $region2: #{tpu_custom_call.1} parent=1 // loop_pre_header
      _
    $region3: #{tpu_custom_call.1} parent=1 // loop_header
      %s35 = sphi 0, %s39
      %p36 = scmp.ge.s32.totalorder %s35, 6
      %s42 = sphi 0, %s54
      %s43 = sphi 0, %s50
      %s44 = sphi 0, %s42
      %s45 = sphi 0, %s43
      %s46 = sphi 0, %s44
      %s47 = sphi 0, %s45
      %s57 = sphi 0, %s59
      %s60 = sphi 0, %s57
      %s61 = sphi 0, %s60
      %s77 = sphi 0, %s61
      %s83 = sphi 0, %s85
      %s86 = sphi 0, %s83
      %s87 = sphi 0, %s86
      %s103 = sphi 0, %s87
      %s109 = sphi 0, %s111
      %s112 = sphi 0, %s109
      %s113 = sphi 0, %s112
      %s129 = sphi 0, %s113
      %s135 = sphi 0, %s137
      %s138 = sphi 0, %s135
      %s139 = sphi 0, %s138
      %s155 = sphi 0, %s139
      %s161 = sphi 0, %s163
      %s164 = sphi 0, %s161
      %s165 = sphi 0, %s164
      %s181 = sphi 0, %s165
      %s187 = sphi 0, %s189
      %s190 = sphi 0, %s187
      %s191 = sphi 0, %s190
      %s207 = sphi 0, %s191
      %s213 = sphi 0, %s215
      %s216 = sphi 0, %s213
      %s217 = sphi 0, %s216
      %s233 = sphi 0, %s217
      %s239 = sphi 0, %s241
      %s242 = sphi 0, %s239
      %s243 = sphi 0, %s242
      %s259 = sphi 0, %s243
      %s265 = sphi 0, %s267
      %s268 = sphi 0, %s265
      %s269 = sphi 0, %s268
      %s285 = sphi 0, %s269
      %s291 = sphi 0, %s293
      %s294 = sphi 0, %s291
      %s295 = sphi 0, %s294
      %s311 = sphi 0, %s295
      %s317 = sphi 0, %s319
      %s320 = sphi 0, %s317
      %s321 = sphi 0, %s320
      %s337 = sphi 0, %s321
      %s343 = sphi 0, %s345
      %s346 = sphi 0, %s343
      %s347 = sphi 0, %s346
      %s363 = sphi 0, %s347
      %s369 = sphi 0, %s371
      %s372 = sphi 0, %s369
      %s373 = sphi 0, %s372
      %s389 = sphi 0, %s373
      %s395 = sphi 0, %s397
      %s398 = sphi 0, %s395
      %s399 = sphi 0, %s398
      %s415 = sphi 0, %s399
      %s419 = sphi 0, %s419
      %s421 = sphi 0, %s419
      %s422 = sphi 0, %s421
      %s436 = sphi 0, %s422
      %s440 = sphi 0, %s440
      %s442 = sphi 0, %s440
      %s443 = sphi 0, %s442
      %s457 = sphi 0, %s443
      %s463 = sphi 0, %s465
      %s466 = sphi 0, %s463
      %s467 = sphi 0, %s466
      %s483 = sphi 0, %s467
    $region4: #{tpu_custom_call.1} parent=1 // loop_header_branch
      %38 = sbr.rel (%p36) target = $region8
    $region5: #{tpu_custom_call.1} parent=1 // loop_body
      %s40 = ssub.s32 %s35, 1
      %s41 = ssub.s32 %s35, 2
      %s48 = sadd.s32 1, %s43
      %p49 = scmp.ge.s32.totalorder %s48, 2
      %s50 = scalar_select %p49, 0, %s48
      %s51 = sadd.s32 1, %s42
      %s52 = scalar_select %p49, %s51, %s42
      %p53 = scmp.ge.s32.totalorder %s52, 2
      %s54 = scalar_select %p53, 0, %s52
      %s55 = ssub.s32 %s42, %s54
      %p56 = scmp.eq.s32.totalorder %s55, 0
      %s58 = sadd.s32 %s57, 1
      %s59 = scalar_select %p56, %s57, %s58
      %p62 = pneg %p56
      %p63 = scmp.eq.s32.totalorder %s35, 3
      %p64 = por %p62, %p63
      %p65 = scmp.ne.s32.totalorder %s57, %s60
      %p66 = scmp.eq.s32.totalorder %s35, 0
      %p67 = por %p65, %p66
      %p68 = scmp.ne.s32.totalorder %s57, %s60
      %p69 = scmp.eq.s32.totalorder %s40, 3
      %p70 = por %p68, %p69
      %p71 = scmp.ne.s32.totalorder %s60, %s61
      %p72 = scmp.eq.s32.totalorder %s40, 0
      %p73 = por %p71, %p72
      %p74 = scmp.ne.s32.totalorder %s60, %s61
      %p75 = scmp.eq.s32.totalorder %s41, 3
      %p76 = por %p74, %p75
      %p78 = scmp.ne.s32.totalorder %s61, %s77
      %p79 = scmp.eq.s32.totalorder %s41, 0
      %p80 = por %p78, %p79
      %s81 = ssub.s32 %s42, %s54
      %p82 = scmp.eq.s32.totalorder %s81, 0
      %s84 = sadd.s32 %s83, 1
      %s85 = scalar_select %p82, %s83, %s84
      %p88 = pneg %p82
      %p89 = scmp.eq.s32.totalorder %s35, 3
      %p90 = por %p88, %p89
      %p91 = scmp.ne.s32.totalorder %s83, %s86
      %p92 = scmp.eq.s32.totalorder %s35, 0
      %p93 = por %p91, %p92
      %p94 = scmp.ne.s32.totalorder %s83, %s86
      %p95 = scmp.eq.s32.totalorder %s40, 3
      %p96 = por %p94, %p95
      %p97 = scmp.ne.s32.totalorder %s86, %s87
      %p98 = scmp.eq.s32.totalorder %s40, 0
      %p99 = por %p97, %p98
      %p100 = scmp.ne.s32.totalorder %s86, %s87
      %p101 = scmp.eq.s32.totalorder %s41, 3
      %p102 = por %p100, %p101
      %p104 = scmp.ne.s32.totalorder %s87, %s103
      %p105 = scmp.eq.s32.totalorder %s41, 0
      %p106 = por %p104, %p105
      %s107 = ssub.s32 %s43, %s50
      %p108 = scmp.eq.s32.totalorder %s107, 0
      %s110 = sadd.s32 %s109, 1
      %s111 = scalar_select %p108, %s109, %s110
      %p114 = pneg %p108
      %p115 = scmp.eq.s32.totalorder %s35, 3
      %p116 = por %p114, %p115
      %p117 = scmp.ne.s32.totalorder %s109, %s112
      %p118 = scmp.eq.s32.totalorder %s35, 0
      %p119 = por %p117, %p118
      %p120 = scmp.ne.s32.totalorder %s109, %s112
      %p121 = scmp.eq.s32.totalorder %s40, 3
      %p122 = por %p120, %p121
      %p123 = scmp.ne.s32.totalorder %s112, %s113
      %p124 = scmp.eq.s32.totalorder %s40, 0
      %p125 = por %p123, %p124
      %p126 = scmp.ne.s32.totalorder %s112, %s113
      %p127 = scmp.eq.s32.totalorder %s41, 3
      %p128 = por %p126, %p127
      %p130 = scmp.ne.s32.totalorder %s113, %s129
      %p131 = scmp.eq.s32.totalorder %s41, 0
      %p132 = por %p130, %p131
      %s133 = ssub.s32 %s43, %s50
      %p134 = scmp.eq.s32.totalorder %s133, 0
      %s136 = sadd.s32 %s135, 1
      %s137 = scalar_select %p134, %s135, %s136
      %p140 = pneg %p134
      %p141 = scmp.eq.s32.totalorder %s35, 3
      %p142 = por %p140, %p141
      %p143 = scmp.ne.s32.totalorder %s135, %s138
      %p144 = scmp.eq.s32.totalorder %s35, 0
      %p145 = por %p143, %p144
      %p146 = scmp.ne.s32.totalorder %s135, %s138
      %p147 = scmp.eq.s32.totalorder %s40, 3
      %p148 = por %p146, %p147
      %p149 = scmp.ne.s32.totalorder %s138, %s139
      %p150 = scmp.eq.s32.totalorder %s40, 0
      %p151 = por %p149, %p150
      %p152 = scmp.ne.s32.totalorder %s138, %s139
      %p153 = scmp.eq.s32.totalorder %s41, 3
      %p154 = por %p152, %p153
      %p156 = scmp.ne.s32.totalorder %s139, %s155
      %p157 = scmp.eq.s32.totalorder %s41, 0
      %p158 = por %p156, %p157
      %s159 = ssub.s32 %s43, %s50
      %p160 = scmp.eq.s32.totalorder %s159, 0
      %s162 = sadd.s32 %s161, 1
      %s163 = scalar_select %p160, %s161, %s162
      %p166 = pneg %p160
      %p167 = scmp.eq.s32.totalorder %s35, 3
      %p168 = por %p166, %p167
      %p169 = scmp.ne.s32.totalorder %s161, %s164
      %p170 = scmp.eq.s32.totalorder %s35, 0
      %p171 = por %p169, %p170
      %p172 = scmp.ne.s32.totalorder %s161, %s164
      %p173 = scmp.eq.s32.totalorder %s40, 3
      %p174 = por %p172, %p173
      %p175 = scmp.ne.s32.totalorder %s164, %s165
      %p176 = scmp.eq.s32.totalorder %s40, 0
      %p177 = por %p175, %p176
      %p178 = scmp.ne.s32.totalorder %s164, %s165
      %p179 = scmp.eq.s32.totalorder %s41, 3
      %p180 = por %p178, %p179
      %p182 = scmp.ne.s32.totalorder %s165, %s181
      %p183 = scmp.eq.s32.totalorder %s41, 0
      %p184 = por %p182, %p183
      %s185 = ssub.s32 %s43, %s50
      %p186 = scmp.eq.s32.totalorder %s185, 0
      %s188 = sadd.s32 %s187, 1
      %s189 = scalar_select %p186, %s187, %s188
      %p192 = pneg %p186
      %p193 = scmp.eq.s32.totalorder %s35, 3
      %p194 = por %p192, %p193
      %p195 = scmp.ne.s32.totalorder %s187, %s190
      %p196 = scmp.eq.s32.totalorder %s35, 0
      %p197 = por %p195, %p196
      %p198 = scmp.ne.s32.totalorder %s187, %s190
      %p199 = scmp.eq.s32.totalorder %s40, 3
      %p200 = por %p198, %p199
      %p201 = scmp.ne.s32.totalorder %s190, %s191
      %p202 = scmp.eq.s32.totalorder %s40, 0
      %p203 = por %p201, %p202
      %p204 = scmp.ne.s32.totalorder %s190, %s191
      %p205 = scmp.eq.s32.totalorder %s41, 3
      %p206 = por %p204, %p205
      %p208 = scmp.ne.s32.totalorder %s191, %s207
      %p209 = scmp.eq.s32.totalorder %s41, 0
      %p210 = por %p208, %p209
      %s211 = ssub.s32 %s43, %s50
      %p212 = scmp.eq.s32.totalorder %s211, 0
      %s214 = sadd.s32 %s213, 1
      %s215 = scalar_select %p212, %s213, %s214
      %p218 = pneg %p212
      %p219 = scmp.eq.s32.totalorder %s35, 3
      %p220 = por %p218, %p219
      %p221 = scmp.ne.s32.totalorder %s213, %s216
      %p222 = scmp.eq.s32.totalorder %s35, 0
      %p223 = por %p221, %p222
      %p224 = scmp.ne.s32.totalorder %s213, %s216
      %p225 = scmp.eq.s32.totalorder %s40, 3
      %p226 = por %p224, %p225
      %p227 = scmp.ne.s32.totalorder %s216, %s217
      %p228 = scmp.eq.s32.totalorder %s40, 0
      %p229 = por %p227, %p228
      %p230 = scmp.ne.s32.totalorder %s216, %s217
      %p231 = scmp.eq.s32.totalorder %s41, 3
      %p232 = por %p230, %p231
      %p234 = scmp.ne.s32.totalorder %s217, %s233
      %p235 = scmp.eq.s32.totalorder %s41, 0
      %p236 = por %p234, %p235
      %s237 = ssub.s32 %s43, %s50
      %p238 = scmp.eq.s32.totalorder %s237, 0
      %s240 = sadd.s32 %s239, 1
      %s241 = scalar_select %p238, %s239, %s240
      %p244 = pneg %p238
      %p245 = scmp.eq.s32.totalorder %s35, 3
      %p246 = por %p244, %p245
      %p247 = scmp.ne.s32.totalorder %s239, %s242
      %p248 = scmp.eq.s32.totalorder %s35, 0
      %p249 = por %p247, %p248
      %p250 = scmp.ne.s32.totalorder %s239, %s242
      %p251 = scmp.eq.s32.totalorder %s40, 3
      %p252 = por %p250, %p251
      %p253 = scmp.ne.s32.totalorder %s242, %s243
      %p254 = scmp.eq.s32.totalorder %s40, 0
      %p255 = por %p253, %p254
      %p256 = scmp.ne.s32.totalorder %s242, %s243
      %p257 = scmp.eq.s32.totalorder %s41, 3
      %p258 = por %p256, %p257
      %p260 = scmp.ne.s32.totalorder %s243, %s259
      %p261 = scmp.eq.s32.totalorder %s41, 0
      %p262 = por %p260, %p261
      %s263 = ssub.s32 %s43, %s50
      %p264 = scmp.eq.s32.totalorder %s263, 0
      %s266 = sadd.s32 %s265, 1
      %s267 = scalar_select %p264, %s265, %s266
      %p270 = pneg %p264
      %p271 = scmp.eq.s32.totalorder %s35, 3
      %p272 = por %p270, %p271
      %p273 = scmp.ne.s32.totalorder %s265, %s268
      %p274 = scmp.eq.s32.totalorder %s35, 0
      %p275 = por %p273, %p274
      %p276 = scmp.ne.s32.totalorder %s265, %s268
      %p277 = scmp.eq.s32.totalorder %s40, 3
      %p278 = por %p276, %p277
      %p279 = scmp.ne.s32.totalorder %s268, %s269
      %p280 = scmp.eq.s32.totalorder %s40, 0
      %p281 = por %p279, %p280
      %p282 = scmp.ne.s32.totalorder %s268, %s269
      %p283 = scmp.eq.s32.totalorder %s41, 3
      %p284 = por %p282, %p283
      %p286 = scmp.ne.s32.totalorder %s269, %s285
      %p287 = scmp.eq.s32.totalorder %s41, 0
      %p288 = por %p286, %p287
      %s289 = ssub.s32 %s43, %s50
      %p290 = scmp.eq.s32.totalorder %s289, 0
      %s292 = sadd.s32 %s291, 1
      %s293 = scalar_select %p290, %s291, %s292
      %p296 = pneg %p290
      %p297 = scmp.eq.s32.totalorder %s35, 3
      %p298 = por %p296, %p297
      %p299 = scmp.ne.s32.totalorder %s291, %s294
      %p300 = scmp.eq.s32.totalorder %s35, 0
      %p301 = por %p299, %p300
      %p302 = scmp.ne.s32.totalorder %s291, %s294
      %p303 = scmp.eq.s32.totalorder %s40, 3
      %p304 = por %p302, %p303
      %p305 = scmp.ne.s32.totalorder %s294, %s295
      %p306 = scmp.eq.s32.totalorder %s40, 0
      %p307 = por %p305, %p306
      %p308 = scmp.ne.s32.totalorder %s294, %s295
      %p309 = scmp.eq.s32.totalorder %s41, 3
      %p310 = por %p308, %p309
      %p312 = scmp.ne.s32.totalorder %s295, %s311
      %p313 = scmp.eq.s32.totalorder %s41, 0
      %p314 = por %p312, %p313
      %s315 = ssub.s32 %s43, %s50
      %p316 = scmp.eq.s32.totalorder %s315, 0
      %s318 = sadd.s32 %s317, 1
      %s319 = scalar_select %p316, %s317, %s318
      %p322 = pneg %p316
      %p323 = scmp.eq.s32.totalorder %s35, 3
      %p324 = por %p322, %p323
      %p325 = scmp.ne.s32.totalorder %s317, %s320
      %p326 = scmp.eq.s32.totalorder %s35, 0
      %p327 = por %p325, %p326
      %p328 = scmp.ne.s32.totalorder %s317, %s320
      %p329 = scmp.eq.s32.totalorder %s40, 3
      %p330 = por %p328, %p329
      %p331 = scmp.ne.s32.totalorder %s320, %s321
      %p332 = scmp.eq.s32.totalorder %s40, 0
      %p333 = por %p331, %p332
      %p334 = scmp.ne.s32.totalorder %s320, %s321
      %p335 = scmp.eq.s32.totalorder %s41, 3
      %p336 = por %p334, %p335
      %p338 = scmp.ne.s32.totalorder %s321, %s337
      %p339 = scmp.eq.s32.totalorder %s41, 0
      %p340 = por %p338, %p339
      %s341 = ssub.s32 %s43, %s50
      %p342 = scmp.eq.s32.totalorder %s341, 0
      %s344 = sadd.s32 %s343, 1
      %s345 = scalar_select %p342, %s343, %s344
      %p348 = pneg %p342
      %p349 = scmp.eq.s32.totalorder %s35, 3
      %p350 = por %p348, %p349
      %p351 = scmp.ne.s32.totalorder %s343, %s346
      %p352 = scmp.eq.s32.totalorder %s35, 0
      %p353 = por %p351, %p352
      %p354 = scmp.ne.s32.totalorder %s343, %s346
      %p355 = scmp.eq.s32.totalorder %s40, 3
      %p356 = por %p354, %p355
      %p357 = scmp.ne.s32.totalorder %s346, %s347
      %p358 = scmp.eq.s32.totalorder %s40, 0
      %p359 = por %p357, %p358
      %p360 = scmp.ne.s32.totalorder %s346, %s347
      %p361 = scmp.eq.s32.totalorder %s41, 3
      %p362 = por %p360, %p361
      %p364 = scmp.ne.s32.totalorder %s347, %s363
      %p365 = scmp.eq.s32.totalorder %s41, 0
      %p366 = por %p364, %p365
      %s367 = ssub.s32 %s43, %s50
      %p368 = scmp.eq.s32.totalorder %s367, 0
      %s370 = sadd.s32 %s369, 1
      %s371 = scalar_select %p368, %s369, %s370
      %p374 = pneg %p368
      %p375 = scmp.eq.s32.totalorder %s35, 3
      %p376 = por %p374, %p375
      %p377 = scmp.ne.s32.totalorder %s369, %s372
      %p378 = scmp.eq.s32.totalorder %s35, 0
      %p379 = por %p377, %p378
      %p380 = scmp.ne.s32.totalorder %s369, %s372
      %p381 = scmp.eq.s32.totalorder %s40, 3
      %p382 = por %p380, %p381
      %p383 = scmp.ne.s32.totalorder %s372, %s373
      %p384 = scmp.eq.s32.totalorder %s40, 0
      %p385 = por %p383, %p384
      %p386 = scmp.ne.s32.totalorder %s372, %s373
      %p387 = scmp.eq.s32.totalorder %s41, 3
      %p388 = por %p386, %p387
      %p390 = scmp.ne.s32.totalorder %s373, %s389
      %p391 = scmp.eq.s32.totalorder %s41, 0
      %p392 = por %p390, %p391
      %s393 = ssub.s32 %s43, %s50
      %p394 = scmp.eq.s32.totalorder %s393, 0
      %s396 = sadd.s32 %s395, 1
      %s397 = scalar_select %p394, %s395, %s396
      %p400 = pneg %p394
      %p401 = scmp.eq.s32.totalorder %s35, 3
      %p402 = por %p400, %p401
      %p403 = scmp.ne.s32.totalorder %s395, %s398
      %p404 = scmp.eq.s32.totalorder %s35, 0
      %p405 = por %p403, %p404
      %p406 = scmp.ne.s32.totalorder %s395, %s398
      %p407 = scmp.eq.s32.totalorder %s40, 3
      %p408 = por %p406, %p407
      %p409 = scmp.ne.s32.totalorder %s398, %s399
      %p410 = scmp.eq.s32.totalorder %s40, 0
      %p411 = por %p409, %p410
      %p412 = scmp.ne.s32.totalorder %s398, %s399
      %p413 = scmp.eq.s32.totalorder %s41, 3
      %p414 = por %p412, %p413
      %p416 = scmp.ne.s32.totalorder %s399, %s415
      %p417 = scmp.eq.s32.totalorder %s41, 0
      %p418 = por %p416, %p417
      %s420 = sadd.s32 %s419, 1
      %p423 = scmp.eq.s32.totalorder %s35, 3
      %p424 = scmp.ne.s32.totalorder %s419, %s421
      %p425 = scmp.eq.s32.totalorder %s35, 0
      %p426 = por %p424, %p425
      %p427 = scmp.ne.s32.totalorder %s419, %s421
      %p428 = scmp.eq.s32.totalorder %s40, 3
      %p429 = por %p427, %p428
      %p430 = scmp.ne.s32.totalorder %s421, %s422
      %p431 = scmp.eq.s32.totalorder %s40, 0
      %p432 = por %p430, %p431
      %p433 = scmp.ne.s32.totalorder %s421, %s422
      %p434 = scmp.eq.s32.totalorder %s41, 3
      %p435 = por %p433, %p434
      %p437 = scmp.ne.s32.totalorder %s422, %s436
      %p438 = scmp.eq.s32.totalorder %s41, 0
      %p439 = por %p437, %p438
      %s441 = sadd.s32 %s440, 1
      %p444 = scmp.eq.s32.totalorder %s35, 3
      %p445 = scmp.ne.s32.totalorder %s440, %s442
      %p446 = scmp.eq.s32.totalorder %s35, 0
      %p447 = por %p445, %p446
      %p448 = scmp.ne.s32.totalorder %s440, %s442
      %p449 = scmp.eq.s32.totalorder %s40, 3
      %p450 = por %p448, %p449
      %p451 = scmp.ne.s32.totalorder %s442, %s443
      %p452 = scmp.eq.s32.totalorder %s40, 0
      %p453 = por %p451, %p452
      %p454 = scmp.ne.s32.totalorder %s442, %s443
      %p455 = scmp.eq.s32.totalorder %s41, 3
      %p456 = por %p454, %p455
      %p458 = scmp.ne.s32.totalorder %s443, %s457
      %p459 = scmp.eq.s32.totalorder %s41, 0
      %p460 = por %p458, %p459
      %s461 = ssub.s32 %s42, %s54
      %p462 = scmp.eq.s32.totalorder %s461, 0
      %s464 = sadd.s32 %s463, 1
      %s465 = scalar_select %p462, %s463, %s464
      %p468 = pneg %p462
      %p469 = scmp.eq.s32.totalorder %s35, 3
      %p470 = por %p468, %p469
      %p471 = scmp.ne.s32.totalorder %s463, %s466
      %p472 = scmp.eq.s32.totalorder %s35, 0
      %p473 = por %p471, %p472
      %p474 = scmp.ne.s32.totalorder %s463, %s466
      %p475 = scmp.eq.s32.totalorder %s40, 3
      %p476 = por %p474, %p475
      %p477 = scmp.ne.s32.totalorder %s466, %s467
      %p478 = scmp.eq.s32.totalorder %s40, 0
      %p479 = por %p477, %p478
      %p480 = scmp.ne.s32.totalorder %s466, %s467
      %p481 = scmp.eq.s32.totalorder %s41, 3
      %p482 = por %p480, %p481
      %p484 = scmp.ne.s32.totalorder %s467, %s483
      %p485 = scmp.eq.s32.totalorder %s41, 0
      %p486 = por %p484, %p485
      %p487 = scmp.le.s32.totalorder 1, %s35
      %p488 = scmp.lt.s32.totalorder %s35, 5
      %p489 = pnand %p487, %p488
      %p490 = pneg %p489
      // Predicated region
      $region9: #{tpu_custom_call.1} parent=5 // pred_check
        _
      $region10: #{tpu_custom_call.1} parent=5 // pred_check_branch
        %492 = sbr.rel (%p489) target = $region12
      $region11: #{tpu_custom_call.1} parent=5 // pred_region
        %s493 = ssub.s32 %s35, 1
        // Predicated region
        $region13: #{tpu_custom_call.1} parent=11 // pred_check
          %p494 = pneg %p432
        $region14: #{tpu_custom_call.1} parent=11 // pred_check_branch
          %496 = sbr.rel (%p494) target = $region16
        $region15: #{tpu_custom_call.1} parent=11 // pred_region
          %498 = vsyncadd [#allocation13], 0
          %s499 = sshll.u32 %s14, 4
          %s500 = int_to_ptr.hbm [resolvable:$true] %s499
          %s501 = sshll.u32 [#allocation12], 4
          %s502 = int_to_ptr.vmem [resolvable:$true] %s501
          %507 = dma.hbm_to_vmem [thread:$0]  %s500, 256, %s502, [#allocation13], 64, 64, 4
        $region16: #{tpu_custom_call.1} parent=11 // pred_fallthru
          _
        // Predicated region
        $region17: #{tpu_custom_call.1} parent=11 // pred_check
          %p508 = pneg %p453
        $region18: #{tpu_custom_call.1} parent=11 // pred_check_branch
          %510 = sbr.rel (%p508) target = $region20
        $region19: #{tpu_custom_call.1} parent=11 // pred_region
          _
        $region20: #{tpu_custom_call.1} parent=11 // pred_fallthru
          _
      $region12: #{tpu_custom_call.1} parent=5 // pred_fallthru
        _
      %p511 = scmp.lt.s32.totalorder %s35, 4
      // Predicated region
      $region21: #{tpu_custom_call.1} parent=5 // pred_check
        %p512 = pneg %p511
      $region22: #{tpu_custom_call.1} parent=5 // pred_check_branch
        %514 = sbr.rel (%p512) target = $region24
      $region23: #{tpu_custom_call.1} parent=5 // pred_region
        // Predicated region
        $region25: #{tpu_custom_call.1} parent=23 // pred_check
          %p515 = pneg %p67
        $region26: #{tpu_custom_call.1} parent=23 // pred_check_branch
          %517 = sbr.rel (%p515) target = $region28
        $region27: #{tpu_custom_call.1} parent=23 // pred_region
          %s518 = sand.u32 %s57, 1
          %s519 = scalar_lea.sflag [#allocation4], %s518
          %s520 = sand.u32 %s57, 1
          %s521 = smul.addr %s520, 8
          %s522 = scalar_lea.vmem [#allocation3], %s521
          %524 = vsyncadd %s519, 0
          %s525 = smul.addr %s42, 8
          %s526 = scalar_lea.hbm %s0, %s525
          %s528 = sshll.u32 %s526, 4
          %s529 = int_to_ptr.hbm [resolvable:$true] %s528
          %s530 = sshll.u32 %s522, 4
          %s531 = int_to_ptr.vmem [resolvable:$true] %s530
          %533 = dma.hbm_to_vmem [thread:$0]  %s529, 128, %s531, %s519
        $region28: #{tpu_custom_call.1} parent=23 // pred_fallthru
          _
        // Predicated region
        $region29: #{tpu_custom_call.1} parent=23 // pred_check
          %p534 = pneg %p93
        $region30: #{tpu_custom_call.1} parent=23 // pred_check_branch
          %536 = sbr.rel (%p534) target = $region32
        $region31: #{tpu_custom_call.1} parent=23 // pred_region
          %s537 = sand.u32 %s35, 1
          %s538 = scalar_lea.sflag [#allocation7], %s537
          %s539 = sand.u32 %s83, 1
          %s540 = scalar_lea.vmem [#allocation6], %s539
          %542 = vsyncadd %s538, 0
          %s543 = scalar_lea.hbm %s1, %s42
          %s545 = sshll.u32 %s543, 4
          %s546 = int_to_ptr.hbm [resolvable:$true] %s545
          %s547 = sshll.u32 %s540, 4
          %s548 = int_to_ptr.vmem [resolvable:$true] %s547
          %550 = dma.hbm_to_vmem [thread:$0]  %s546, 16, %s548, %s538
        $region32: #{tpu_custom_call.1} parent=23 // pred_fallthru
          _
        // Predicated region
        $region33: #{tpu_custom_call.1} parent=23 // pred_check
          %p551 = pneg %p119
        $region34: #{tpu_custom_call.1} parent=23 // pred_check_branch
          %553 = sbr.rel (%p551) target = $region36
        $region35: #{tpu_custom_call.1} parent=23 // pred_region
          %p554 = scmp.lt.s32.totalorder %s43, 1
          %s555 = scalar_select %p554, %s43, 1
          %s556 = smul.addr %s555, 4
          %s557 = smul.addr %s556, 4
          %s558 = scalar_lea.vmem %s2, %s557
        $region36: #{tpu_custom_call.1} parent=23 // pred_fallthru
          _
        // Predicated region
        $region37: #{tpu_custom_call.1} parent=23 // pred_check
          %p559 = pneg %p145
        $region38: #{tpu_custom_call.1} parent=23 // pred_check_branch
          %561 = sbr.rel (%p559) target = $region40
        $region39: #{tpu_custom_call.1} parent=23 // pred_region
          %s562 = sand.u32 %s35, 1
          %s563 = scalar_lea.sflag [#allocation7], %s562
          %s564 = sand.u32 %s135, 1
          %s565 = scalar_lea.vmem [#allocation8], %s564
          %567 = vsyncadd %s563, 0
          %s568 = scalar_lea.hbm %s3, %s43
          %s570 = sshll.u32 %s568, 4
          %s571 = int_to_ptr.hbm [resolvable:$true] %s570
          %s572 = sshll.u32 %s565, 4
          %s573 = int_to_ptr.vmem [resolvable:$true] %s572
          %575 = dma.hbm_to_vmem [thread:$0]  %s571, 16, %s573, %s563
        $region40: #{tpu_custom_call.1} parent=23 // pred_fallthru
          _
        // Predicated region
        $region41: #{tpu_custom_call.1} parent=23 // pred_check
          %p576 = pneg %p171
        $region42: #{tpu_custom_call.1} parent=23 // pred_check_branch
          %578 = sbr.rel (%p576) target = $region44
        $region43: #{tpu_custom_call.1} parent=23 // pred_region
          %p579 = scmp.lt.s32.totalorder %s43, 1
          %s580 = scalar_select %p579, %s43, 1
          %s581 = smul.addr %s580, 4
          %s582 = smul.addr %s581, 4
          %s583 = scalar_lea.vmem %s4, %s582
        $region44: #{tpu_custom_call.1} parent=23 // pred_fallthru
          _
        // Predicated region
        $region45: #{tpu_custom_call.1} parent=23 // pred_check
          %p584 = pneg %p197
        $region46: #{tpu_custom_call.1} parent=23 // pred_check_branch
          %586 = sbr.rel (%p584) target = $region48
        $region47: #{tpu_custom_call.1} parent=23 // pred_region
          %p587 = scmp.lt.s32.totalorder %s43, 1
          %s588 = scalar_select %p587, %s43, 1
          %s589 = scalar_lea.vmem %s5, %s588
        $region48: #{tpu_custom_call.1} parent=23 // pred_fallthru
          _
        // Predicated region
        $region49: #{tpu_custom_call.1} parent=23 // pred_check
          %p590 = pneg %p223
        $region50: #{tpu_custom_call.1} parent=23 // pred_check_branch
          %592 = sbr.rel (%p590) target = $region52
        $region51: #{tpu_custom_call.1} parent=23 // pred_region
          %p593 = scmp.lt.s32.totalorder %s43, 1
          %s594 = scalar_select %p593, %s43, 1
          %s595 = scalar_lea.vmem %s6, %s594
        $region52: #{tpu_custom_call.1} parent=23 // pred_fallthru
          _
        // Predicated region
        $region53: #{tpu_custom_call.1} parent=23 // pred_check
          %p596 = pneg %p249
        $region54: #{tpu_custom_call.1} parent=23 // pred_check_branch
          %598 = sbr.rel (%p596) target = $region56
        $region55: #{tpu_custom_call.1} parent=23 // pred_region
          %s599 = sand.u32 %s35, 1
          %s600 = scalar_lea.sflag [#allocation10], %s599
          %s601 = sand.u32 %s239, 1
          %s602 = scalar_lea.vmem [#allocation9], %s601
          %604 = vsyncadd %s600, 0
          %s605 = scalar_lea.hbm %s7, %s43
          %s607 = sshll.u32 %s605, 4
          %s608 = int_to_ptr.hbm [resolvable:$true] %s607
          %s609 = sshll.u32 %s602, 4
          %s610 = int_to_ptr.vmem [resolvable:$true] %s609
          %612 = dma.hbm_to_vmem [thread:$0]  %s608, 16, %s610, %s600
        $region56: #{tpu_custom_call.1} parent=23 // pred_fallthru
          _
        // Predicated region
        $region57: #{tpu_custom_call.1} parent=23 // pred_check
          %p613 = pneg %p275
        $region58: #{tpu_custom_call.1} parent=23 // pred_check_branch
          %615 = sbr.rel (%p613) target = $region60
        $region59: #{tpu_custom_call.1} parent=23 // pred_region
          %p616 = scmp.lt.s32.totalorder %s43, 1
          %s617 = scalar_select %p616, %s43, 1
          %s618 = smul.addr %s617, 4
          %s619 = smul.addr %s618, 4
          %s620 = scalar_lea.vmem %s8, %s619
        $region60: #{tpu_custom_call.1} parent=23 // pred_fallthru
          _
        // Predicated region
        $region61: #{tpu_custom_call.1} parent=23 // pred_check
          %p621 = pneg %p301
        $region62: #{tpu_custom_call.1} parent=23 // pred_check_branch
          %623 = sbr.rel (%p621) target = $region64
        $region63: #{tpu_custom_call.1} parent=23 // pred_region
          %p624 = scmp.lt.s32.totalorder %s43, 1
          %s625 = scalar_select %p624, %s43, 1
          %s626 = scalar_lea.vmem %s9, %s625
        $region64: #{tpu_custom_call.1} parent=23 // pred_fallthru
          _
        // Predicated region
        $region65: #{tpu_custom_call.1} parent=23 // pred_check
          %p627 = pneg %p327
        $region66: #{tpu_custom_call.1} parent=23 // pred_check_branch
          %629 = sbr.rel (%p627) target = $region68
        $region67: #{tpu_custom_call.1} parent=23 // pred_region
          %p630 = scmp.lt.s32.totalorder %s43, 1
          %s631 = scalar_select %p630, %s43, 1
          %s632 = smul.addr %s631, 8
          %s633 = smul.addr %s632, 4
          %s634 = scalar_lea.vmem %s10, %s633
        $region68: #{tpu_custom_call.1} parent=23 // pred_fallthru
          _
        // Predicated region
        $region69: #{tpu_custom_call.1} parent=23 // pred_check
          %p635 = pneg %p353
        $region70: #{tpu_custom_call.1} parent=23 // pred_check_branch
          %637 = sbr.rel (%p635) target = $region72
        $region71: #{tpu_custom_call.1} parent=23 // pred_region
          %p638 = scmp.lt.s32.totalorder %s43, 1
          %s639 = scalar_select %p638, %s43, 1
          %s640 = scalar_lea.vmem %s11, %s639
        $region72: #{tpu_custom_call.1} parent=23 // pred_fallthru
          _
        // Predicated region
        $region73: #{tpu_custom_call.1} parent=23 // pred_check
          %p641 = pneg %p379
        $region74: #{tpu_custom_call.1} parent=23 // pred_check_branch
          %643 = sbr.rel (%p641) target = $region76
        $region75: #{tpu_custom_call.1} parent=23 // pred_region
          %p644 = scmp.lt.s32.totalorder %s43, 1
          %s645 = scalar_select %p644, %s43, 1
          %s646 = scalar_lea.vmem %s12, %s645
        $region76: #{tpu_custom_call.1} parent=23 // pred_fallthru
          _
        // Predicated region
        $region77: #{tpu_custom_call.1} parent=23 // pred_check
          %p647 = pneg %p405
        $region78: #{tpu_custom_call.1} parent=23 // pred_check_branch
          %649 = sbr.rel (%p647) target = $region80
        $region79: #{tpu_custom_call.1} parent=23 // pred_region
          %s650 = sand.u32 %s35, 1
          %s651 = scalar_lea.sflag [#allocation10], %s650
          %s652 = sand.u32 %s395, 1
          %s653 = scalar_lea.vmem [#allocation11], %s652
          %655 = vsyncadd %s651, 0
          %s656 = scalar_lea.hbm %s13, %s43
          %s658 = sshll.u32 %s656, 4
          %s659 = int_to_ptr.hbm [resolvable:$true] %s658
          %s660 = sshll.u32 %s653, 4
          %s661 = int_to_ptr.vmem [resolvable:$true] %s660
          %663 = dma.hbm_to_vmem [thread:$0]  %s659, 16, %s661, %s651
        $region80: #{tpu_custom_call.1} parent=23 // pred_fallthru
          _
      $region24: #{tpu_custom_call.1} parent=5 // pred_fallthru
        _
      %p664 = scmp.le.s32.totalorder 1, %s35
      %p665 = scmp.lt.s32.totalorder %s35, 5
      %p666 = pnand %p664, %p665
      %p667 = pneg %p666
      // Predicated region
      $region81: #{tpu_custom_call.1} parent=5 // pred_check
        _
      $region82: #{tpu_custom_call.1} parent=5 // pred_check_branch
        %669 = sbr.rel (%p666) target = $region84
      $region83: #{tpu_custom_call.1} parent=5 // pred_region
        %s670 = ssub.s32 %s35, 1
        %s671 = sand.u32 %s60, 1
        %s672 = scalar_lea.sflag [#allocation4], %s671
        %s673 = sand.u32 %s60, 1
        %s674 = smul.addr %s673, 8
        %s675 = scalar_lea.vmem [#allocation3], %s674
        // Predicated region
        $region85: #{tpu_custom_call.1} parent=83 // pred_check
          %p676 = pneg %p73
        $region86: #{tpu_custom_call.1} parent=83 // pred_check_branch
          %678 = sbr.rel (%p676) target = $region88
        $region87: #{tpu_custom_call.1} parent=83 // pred_region
          %680 = dma.done %s672, 128
        $region88: #{tpu_custom_call.1} parent=83 // pred_fallthru
          _
        %s681 = sand.u32 %s40, 1
        %s682 = scalar_lea.sflag [#allocation7], %s681
        %s683 = sand.u32 %s86, 1
        %s684 = scalar_lea.vmem [#allocation6], %s683
        // Predicated region
        $region89: #{tpu_custom_call.1} parent=83 // pred_check
          %p685 = pneg %p99
        $region90: #{tpu_custom_call.1} parent=83 // pred_check_branch
          %687 = sbr.rel (%p685) target = $region92
        $region91: #{tpu_custom_call.1} parent=83 // pred_region
          %689 = dma.done %s682, 16
        $region92: #{tpu_custom_call.1} parent=83 // pred_fallthru
          _
        %s690 = sand.u32 %s40, 1
        %s691 = scalar_lea.sflag [#allocation7], %s690
        %s692 = sand.u32 %s138, 1
        %s693 = scalar_lea.vmem [#allocation8], %s692
        // Predicated region
        $region93: #{tpu_custom_call.1} parent=83 // pred_check
          %p694 = pneg %p151
        $region94: #{tpu_custom_call.1} parent=83 // pred_check_branch
          %696 = sbr.rel (%p694) target = $region96
        $region95: #{tpu_custom_call.1} parent=83 // pred_region
          %698 = dma.done %s691, 16
        $region96: #{tpu_custom_call.1} parent=83 // pred_fallthru
          _
        %s699 = sand.u32 %s40, 1
        %s700 = scalar_lea.sflag [#allocation10], %s699
        %s701 = sand.u32 %s242, 1
        %s702 = scalar_lea.vmem [#allocation9], %s701
        // Predicated region
        $region97: #{tpu_custom_call.1} parent=83 // pred_check
          %p703 = pneg %p255
        $region98: #{tpu_custom_call.1} parent=83 // pred_check_branch
          %705 = sbr.rel (%p703) target = $region100
        $region99: #{tpu_custom_call.1} parent=83 // pred_region
          %707 = dma.done %s700, 16
        $region100: #{tpu_custom_call.1} parent=83 // pred_fallthru
          _
        %s708 = sand.u32 %s40, 1
        %s709 = scalar_lea.sflag [#allocation10], %s708
        %s710 = sand.u32 %s398, 1
        %s711 = scalar_lea.vmem [#allocation11], %s710
        // Predicated region
        $region101: #{tpu_custom_call.1} parent=83 // pred_check
          %p712 = pneg %p411
        $region102: #{tpu_custom_call.1} parent=83 // pred_check_branch
          %714 = sbr.rel (%p712) target = $region104
        $region103: #{tpu_custom_call.1} parent=83 // pred_region
          %716 = dma.done %s709, 16
        $region104: #{tpu_custom_call.1} parent=83 // pred_fallthru
          _
        // Predicated region
        $region105: #{tpu_custom_call.1} parent=83 // pred_check
          %p717 = pneg %p432
        $region106: #{tpu_custom_call.1} parent=83 // pred_check_branch
          %719 = sbr.rel (%p717) target = $region108
        $region107: #{tpu_custom_call.1} parent=83 // pred_region
          %721 = dma.done [#allocation13], 256
        $region108: #{tpu_custom_call.1} parent=83 // pred_fallthru
          _
        %s722 = sand.u32 %s60, 1
        %s723 = scalar_lea.sflag [#allocation4], %s722
        %s724 = sand.u32 %s60, 1
        %s725 = smul.addr %s724, 8
        %s726 = scalar_lea.vmem [#allocation3], %s725
        %p727 = pneg %p73
        %p728 = pneg %p70
        %s729 = sand.u32 %s40, 1
        %s730 = scalar_lea.sflag [#allocation7], %s729
        %s731 = sand.u32 %s86, 1
        %s732 = scalar_lea.vmem [#allocation6], %s731
        %p733 = pneg %p99
        %p734 = pneg %p96
        %p735 = scmp.lt.s32.totalorder %s45, 1
        %s736 = scalar_select %p735, %s45, 1
        %s737 = smul.addr %s736, 4
        %s738 = smul.addr %s737, 4
        %s739 = scalar_lea.vmem %s2, %s738
        %p740 = pneg %p125
        %p741 = pneg %p122
        %s742 = sand.u32 %s40, 1
        %s743 = scalar_lea.sflag [#allocation7], %s742
        %s744 = sand.u32 %s138, 1
        %s745 = scalar_lea.vmem [#allocation8], %s744
        %p746 = pneg %p151
        %p747 = pneg %p148
        %p748 = scmp.lt.s32.totalorder %s45, 1
        %s749 = scalar_select %p748, %s45, 1
        %s750 = smul.addr %s749, 4
        %s751 = smul.addr %s750, 4
        %s752 = scalar_lea.vmem %s4, %s751
        %p753 = pneg %p177
        %p754 = pneg %p174
        %p755 = scmp.lt.s32.totalorder %s45, 1
        %s756 = scalar_select %p755, %s45, 1
        %s757 = scalar_lea.vmem %s5, %s756
        %p758 = pneg %p203
        %p759 = pneg %p200
        %p760 = scmp.lt.s32.totalorder %s45, 1
        %s761 = scalar_select %p760, %s45, 1
        %s762 = scalar_lea.vmem %s6, %s761
        %p763 = pneg %p229
        %p764 = pneg %p226
        %s765 = sand.u32 %s40, 1
        %s766 = scalar_lea.sflag [#allocation10], %s765
        %s767 = sand.u32 %s242, 1
        %s768 = scalar_lea.vmem [#allocation9], %s767
        %p769 = pneg %p255
        %p770 = pneg %p252
        %p771 = scmp.lt.s32.totalorder %s45, 1
        %s772 = scalar_select %p771, %s45, 1
        %s773 = smul.addr %s772, 4
        %s774 = smul.addr %s773, 4
        %s775 = scalar_lea.vmem %s8, %s774
        %p776 = pneg %p281
        %p777 = pneg %p278
        %p778 = scmp.lt.s32.totalorder %s45, 1
        %s779 = scalar_select %p778, %s45, 1
        %s780 = scalar_lea.vmem %s9, %s779
        %p781 = pneg %p307
        %p782 = pneg %p304
        %p783 = scmp.lt.s32.totalorder %s45, 1
        %s784 = scalar_select %p783, %s45, 1
        %s785 = smul.addr %s784, 8
        %s786 = smul.addr %s785, 4
        %s787 = scalar_lea.vmem %s10, %s786
        %p788 = pneg %p333
        %p789 = pneg %p330
        %p790 = scmp.lt.s32.totalorder %s45, 1
        %s791 = scalar_select %p790, %s45, 1
        %s792 = scalar_lea.vmem %s11, %s791
        %p793 = pneg %p359
        %p794 = pneg %p356
        %p795 = scmp.lt.s32.totalorder %s45, 1
        %s796 = scalar_select %p795, %s45, 1
        %s797 = scalar_lea.vmem %s12, %s796
        %p798 = pneg %p385
        %p799 = pneg %p382
        %s800 = sand.u32 %s40, 1
        %s801 = scalar_lea.sflag [#allocation10], %s800
        %s802 = sand.u32 %s398, 1
        %s803 = scalar_lea.vmem [#allocation11], %s802
        %p804 = pneg %p411
        %p805 = pneg %p408
        %p806 = pneg %p432
        %p807 = pneg %p429
        %p808 = pneg %p453
        %p809 = pneg %p450
        %p810 = pneg %p479
        %p811 = pneg %p476
        %s812 = sand.u32 %s466, 1
        %s813 = scalar_lea.sflag [#allocation5], %s812
        %s814 = sand.u32 %s466, 1
        %s815 = smul.addr %s814, 8
        %s816 = scalar_lea.vmem [#allocation14], %s815
        %p817 = scmp.lt.s32.totalorder %s45, 1
        %s818 = scalar_select %p817, %s45, 1
        %s819 = smul.addr %s818, 4
        %s820 = smul.addr %s819, 4
        %s821 = scalar_lea.vmem %s2, %s820
        %p822 = scmp.lt.s32.totalorder %s45, 1
        %s823 = scalar_select %p822, %s45, 1
        %s824 = smul.addr %s823, 4
        %s825 = smul.addr %s824, 4
        %s826 = scalar_lea.vmem %s4, %s825
        %p827 = scmp.lt.s32.totalorder %s45, 1
        %s828 = scalar_select %p827, %s45, 1
        %s829 = scalar_lea.vmem %s5, %s828
        %p830 = scmp.lt.s32.totalorder %s45, 1
        %s831 = scalar_select %p830, %s45, 1
        %s832 = scalar_lea.vmem %s6, %s831
        %p833 = scmp.lt.s32.totalorder %s45, 1
        %s834 = scalar_select %p833, %s45, 1
        %s835 = smul.addr %s834, 4
        %s836 = smul.addr %s835, 4
        %s837 = scalar_lea.vmem %s8, %s836
        %p838 = scmp.lt.s32.totalorder %s45, 1
        %s839 = scalar_select %p838, %s45, 1
        %s840 = scalar_lea.vmem %s9, %s839
        %p841 = scmp.lt.s32.totalorder %s45, 1
        %s842 = scalar_select %p841, %s45, 1
        %s843 = smul.addr %s842, 8
        %s844 = smul.addr %s843, 4
        %s845 = scalar_lea.vmem %s10, %s844
        %p846 = scmp.lt.s32.totalorder %s45, 1
        %s847 = scalar_select %p846, %s45, 1
        %s848 = scalar_lea.vmem %s11, %s847
        %p849 = scmp.lt.s32.totalorder %s45, 1
        %s850 = scalar_select %p849, %s45, 1
        %s851 = scalar_lea.vmem %s12, %s850
        %p853 = scmp.eq.s32.totalorder %s45, 0
        // Predicated region
        $region109: #{tpu_custom_call.1} parent=83 // pred_check
          %p854 = pneg %p853
        $region110: #{tpu_custom_call.1} parent=83 // pred_check_branch
          %856 = sbr.rel (%p854) target = $region112
        $region111: #{tpu_custom_call.1} parent=83 // pred_region
          %v857 = vld [vmem:[%s675] sm:$0xff]
          %vm858 = vcmask 261120
          %859 = vst.msk [vmem:[#allocation2] sm:$0xff] %vm858, %v857
        $region112: #{tpu_custom_call.1} parent=83 // pred_fallthru
          _
        %v860 = vld [vmem:[#allocation2] sm:$0xff]
        %v861 = vpack.c.bf16 %v860, %v860
        %v862 = vld [vmem:[%s821] sm:$0xf]
        %v863 = vld [vmem:[%s821 + $0x4] sm:$0xf]
        %v864 = vld [vmem:[%s821 + $0x8] sm:$0xf]
        %v865 = vld [vmem:[%s821 + $0xc] sm:$0xf]
        %v866 = vld [vmem:[%s693] sm:$0x1]
        %v868 = vperm.slane %v866, 0
        %v874 = vunpack.c.l.b16 %v862
        %v875 = vunpack.c.l.b16 %v863
        %v876 = vunpack.c.l.b16 %v864
        %v877 = vunpack.c.l.b16 %v865
        %v878 = vpack.c.b16 %v875, %v874
        %v879 = vpack.c.b16 %v877, %v876
        %vm882 = vcmask 261120
        %v884 = vsel %vm882, %v861, 0
        %886 = vmatpush.bf16.msra.mxu0 0
        %887 = vmatpush.bf16.msra.mxu0 0
        %888 = vmatpush.bf16.msra.mxu0 0
        %889 = vmatpush.bf16.msra.mxu0 0
        %890 = vmatpush.bf16.msra.mxu0 0
        %891 = vmatpush.bf16.msra.mxu0 0
        %892 = vmatpush.bf16.msra.mxu0 %v879
        %893 = vmatpush.bf16.msra.mxu0 %v878
        %894 = vmatmul.bf16.gmra.mxu0 %v884
        %v895 = vpop.f32.mrf.mxu0
        %v896 = vadd.f32 %v868, %v895
        %v897 = vpop.f32.mrf.mxu0
        %898 = vdwg.mxu0
        %900 = vrot.lane.b32.xlu0 %v896, 120
        %v901 = vpop.permute.xlu0 %900
        %903 = vrot.lane.b32.xlu0 %v896, 112
        %v904 = vpop.permute.xlu0 %903
        %906 = vrot.lane.b32.xlu0 %v896, 104
        %v907 = vpop.permute.xlu0 %906
        %909 = vrot.lane.b32.xlu0 %v896, 96
        %v910 = vpop.permute.xlu0 %909
        %912 = vrot.lane.b32.xlu0 %v896, 88
        %v913 = vpop.permute.xlu0 %912
        %915 = vrot.lane.b32.xlu0 %v896, 80
        %v916 = vpop.permute.xlu0 %915
        %918 = vrot.lane.b32.xlu0 %v896, 72
        %v919 = vpop.permute.xlu0 %918
        %921 = vrot.lane.b32.xlu0 %v896, 64
        %v922 = vpop.permute.xlu0 %921
        %924 = vrot.lane.b32.xlu0 %v896, 56
        %v925 = vpop.permute.xlu0 %924
        %927 = vrot.lane.b32.xlu0 %v896, 48
        %v928 = vpop.permute.xlu0 %927
        %930 = vrot.lane.b32.xlu0 %v896, 40
        %v931 = vpop.permute.xlu0 %930
        %v933 = vrot.slane %v904, 4
        %vm934 = vcmask 1047556
        %v935 = vsel %vm934, %v933, %v896
        %v936 = vrot.slane %v896, 4
        %v937 = vsel %vm934, %v904, %v936
        %v939 = vunpack.c.l.s4 1983009808
        %v940 = vunpack.c.0.s8 %v939
        %v941 = vperm.slane %v935, %v940
        %v943 = vunpack.c.l.s4 1983009808
        %v944 = vunpack.c.0.s8 %v943
        %v945 = vperm.slane %v937, %v944
        %v946 = vrot.slane %v907, 4
        %v947 = vsel %vm934, %v946, %v901
        %v948 = vrot.slane %v901, 4
        %v949 = vsel %vm934, %v907, %v948
        %v951 = vunpack.c.l.s4 1983009808
        %v952 = vunpack.c.0.s8 %v951
        %v953 = vperm.slane %v947, %v952
        %v955 = vunpack.c.l.s4 1983009808
        %v956 = vunpack.c.0.s8 %v955
        %v957 = vperm.slane %v949, %v956
        %v958 = vrot.slane %v916, 4
        %v959 = vsel %vm934, %v958, %v910
        %v960 = vrot.slane %v910, 4
        %v961 = vsel %vm934, %v916, %v960
        %v963 = vunpack.c.l.s4 1983009808
        %v964 = vunpack.c.0.s8 %v963
        %v965 = vperm.slane %v959, %v964
        %v967 = vunpack.c.l.s4 1983009808
        %v968 = vunpack.c.0.s8 %v967
        %v969 = vperm.slane %v961, %v968
        %v970 = vrot.slane %v919, 4
        %v971 = vsel %vm934, %v970, %v913
        %v972 = vrot.slane %v913, 4
        %v973 = vsel %vm934, %v919, %v972
        %v975 = vunpack.c.l.s4 1983009808
        %v976 = vunpack.c.0.s8 %v975
        %v977 = vperm.slane %v971, %v976
        %v979 = vunpack.c.l.s4 1983009808
        %v980 = vunpack.c.0.s8 %v979
        %v981 = vperm.slane %v973, %v980
        %v982 = vrot.slane %v953, 4
        %v983 = vsel %vm934, %v982, %v941
        %v984 = vrot.slane %v941, 4
        %v985 = vsel %vm934, %v953, %v984
        %v987 = vunpack.c.l.s4 1934713408
        %v988 = vunpack.c.0.s8 %v987
        %v989 = vperm.slane %v983, %v988
        %v991 = vunpack.c.l.s4 1934713408
        %v992 = vunpack.c.0.s8 %v991
        %v993 = vperm.slane %v985, %v992
        %v994 = vrot.slane %v957, 4
        %v995 = vsel %vm934, %v994, %v945
        %v996 = vrot.slane %v945, 4
        %v997 = vsel %vm934, %v957, %v996
        %v999 = vunpack.c.l.s4 1934713408
        %v1000 = vunpack.c.0.s8 %v999
        %v1001 = vperm.slane %v995, %v1000
        %v1003 = vunpack.c.l.s4 1934713408
        %v1004 = vunpack.c.0.s8 %v1003
        %v1005 = vperm.slane %v997, %v1004
        %v1006 = vrot.slane %v977, 4
        %v1007 = vsel %vm934, %v1006, %v965
        %v1008 = vrot.slane %v965, 4
        %v1009 = vsel %vm934, %v977, %v1008
        %v1011 = vunpack.c.l.s4 1934713408
        %v1012 = vunpack.c.0.s8 %v1011
        %v1013 = vperm.slane %v1007, %v1012
        %v1015 = vunpack.c.l.s4 1934713408
        %v1016 = vunpack.c.0.s8 %v1015
        %v1017 = vperm.slane %v1009, %v1016
        %v1018 = vrot.slane %v981, 4
        %v1019 = vsel %vm934, %v1018, %v969
        %v1020 = vrot.slane %v969, 4
        %v1021 = vsel %vm934, %v981, %v1020
        %v1023 = vunpack.c.l.s4 1934713408
        %v1024 = vunpack.c.0.s8 %v1023
        %v1025 = vperm.slane %v1019, %v1024
        %v1027 = vunpack.c.l.s4 1934713408
        %v1028 = vunpack.c.0.s8 %v1027
        %v1029 = vperm.slane %v1021, %v1028
        %v1030 = vrot.slane %v1013, 4
        %v1031 = vsel %vm934, %v1030, %v989
        %v1032 = vrot.slane %v989, 4
        %v1033 = vsel %vm934, %v1013, %v1032
        %v1034 = vrot.slane %v1017, 4
        %v1035 = vsel %vm934, %v1034, %v993
        %v1036 = vrot.slane %v993, 4
        %v1037 = vsel %vm934, %v1017, %v1036
        %v1038 = vrot.slane %v1025, 4
        %v1039 = vsel %vm934, %v1038, %v1001
        %v1040 = vrot.slane %v1001, 4
        %v1041 = vsel %vm934, %v1025, %v1040
        %v1042 = vrot.slane %v1029, 4
        %v1043 = vsel %vm934, %v1042, %v1005
        %v1044 = vrot.slane %v1005, 4
        %v1045 = vsel %vm934, %v1029, %v1044
        %v1046 = vrot.slane %v928, 4
        %v1047 = vsel %vm934, %v1046, %v922
        %v1048 = vrot.slane %v922, 4
        %v1049 = vsel %vm934, %v928, %v1048
        %v1051 = vunpack.c.l.s4 1983009808
        %v1052 = vunpack.c.0.s8 %v1051
        %v1053 = vperm.slane %v1047, %v1052
        %v1055 = vunpack.c.l.s4 1983009808
        %v1056 = vunpack.c.0.s8 %v1055
        %v1057 = vperm.slane %v1049, %v1056
        %v1058 = vrot.slane %v931, 4
        %v1059 = vsel %vm934, %v1058, %v925
        %v1060 = vrot.slane %v925, 4
        %v1061 = vsel %vm934, %v931, %v1060
        %v1063 = vunpack.c.l.s4 1983009808
        %v1064 = vunpack.c.0.s8 %v1063
        %v1065 = vperm.slane %v1059, %v1064
        %v1067 = vunpack.c.l.s4 1983009808
        %v1068 = vunpack.c.0.s8 %v1067
        %v1069 = vperm.slane %v1061, %v1068
        %v1070 = vrot.slane %v1065, 4
        %v1071 = vsel %vm934, %v1070, %v1053
        %v1072 = vrot.slane %v1053, 4
        %v1073 = vsel %vm934, %v1065, %v1072
        %v1075 = vunpack.c.l.s4 1934713408
        %v1076 = vunpack.c.0.s8 %v1075
        %v1077 = vperm.slane %v1071, %v1076
        %v1079 = vunpack.c.l.s4 1934713408
        %v1080 = vunpack.c.0.s8 %v1079
        %v1081 = vperm.slane %v1073, %v1080
        %v1082 = vrot.slane %v1069, 4
        %v1083 = vsel %vm934, %v1082, %v1057
        %v1084 = vrot.slane %v1057, 4
        %v1085 = vsel %vm934, %v1069, %v1084
        %v1087 = vunpack.c.l.s4 1934713408
        %v1088 = vunpack.c.0.s8 %v1087
        %v1089 = vperm.slane %v1083, %v1088
        %v1091 = vunpack.c.l.s4 1934713408
        %v1092 = vunpack.c.0.s8 %v1091
        %v1093 = vperm.slane %v1085, %v1092
        %v1094 = vrot.slane %v1077, 4
        %v1095 = vsel %vm934, 0.0, %v1094
        %v1096 = vrot.slane %v1081, 4
        %v1097 = vsel %vm934, 0.0, %v1096
        %v1098 = vrot.slane %v1089, 4
        %v1099 = vsel %vm934, 0.0, %v1098
        %v1100 = vrot.slane %v1093, 4
        %v1101 = vsel %vm934, 0.0, %v1100
        %v1102 = vpack.c.bf16 %v1031, %v1031
        %v1103 = vpack.c.bf16 %v1077, %v1077
        %v1104 = vpack.c.bf16 %v1033, %v1033
        %v1105 = vpack.c.bf16 %v1095, %v1095
        %v1106 = vpack.c.bf16 %v1035, %v1035
        %v1107 = vpack.c.bf16 %v1081, %v1081
        %v1108 = vpack.c.bf16 %v1037, %v1037
        %v1109 = vpack.c.bf16 %v1097, %v1097
        %v1110 = vpack.c.bf16 %v1039, %v1039
        %v1111 = vpack.c.bf16 %v1089, %v1089
        %v1112 = vpack.c.bf16 %v1041, %v1041
        %v1113 = vpack.c.bf16 %v1099, %v1099
        %v1114 = vpack.c.bf16 %v1043, %v1043
        %v1115 = vpack.c.bf16 %v1093, %v1093
        %v1116 = vpack.c.bf16 %v1045, %v1045
        %v1117 = vpack.c.bf16 %v1101, %v1101
        %v1118 = vrot.slane %v1110, 4
        %vm1119 = vcmask 1047556
        %v1120 = vsel %vm1119, %v1118, %v1102
        %v1122 = vunpack.c.l.s4 1983009808
        %v1123 = vunpack.c.0.s8 %v1122
        %v1124 = vperm.slane %v1120, %v1123
        %v1125 = vrot.slane %v1114, 4
        %v1126 = vsel %vm1119, %v1125, %v1106
        %v1128 = vunpack.c.l.s4 1983009808
        %v1129 = vunpack.c.0.s8 %v1128
        %v1130 = vperm.slane %v1126, %v1129
        %v1131 = vrot.slane %v1130, 4
        %v1132 = vsel %vm1119, %v1131, %v1124
        %v1133 = vrot.slane %v1124, 4
        %v1134 = vsel %vm1119, %v1130, %v1133
        %v1136 = vunpack.c.l.s4 1934713408
        %v1137 = vunpack.c.0.s8 %v1136
        %v1138 = vperm.slane %v1132, %v1137
        %v1140 = vunpack.c.l.s4 1934713408
        %v1141 = vunpack.c.0.s8 %v1140
        %v1142 = vperm.slane %v1134, %v1141
        %v1143 = vrot.slane %v1138, 4
        %v1144 = vsel %vm1119, 0, %v1143
        %v1145 = vrot.slane %v1142, 4
        %v1146 = vsel %vm1119, 0, %v1145
        %v1147 = vrot.slane %v1112, 4
        %v1148 = vsel %vm1119, %v1147, %v1104
        %v1150 = vunpack.c.l.s4 1983009808
        %v1151 = vunpack.c.0.s8 %v1150
        %v1152 = vperm.slane %v1148, %v1151
        %v1153 = vrot.slane %v1116, 4
        %v1154 = vsel %vm1119, %v1153, %v1108
        %v1156 = vunpack.c.l.s4 1983009808
        %v1157 = vunpack.c.0.s8 %v1156
        %v1158 = vperm.slane %v1154, %v1157
        %v1159 = vrot.slane %v1158, 4
        %v1160 = vsel %vm1119, %v1159, %v1152
        %v1161 = vrot.slane %v1152, 4
        %v1162 = vsel %vm1119, %v1158, %v1161
        %v1164 = vunpack.c.l.s4 1934713408
        %v1165 = vunpack.c.0.s8 %v1164
        %v1166 = vperm.slane %v1160, %v1165
        %v1168 = vunpack.c.l.s4 1934713408
        %v1169 = vunpack.c.0.s8 %v1168
        %v1170 = vperm.slane %v1162, %v1169
        %v1171 = vrot.slane %v1166, 4
        %v1172 = vsel %vm1119, 0, %v1171
        %v1173 = vrot.slane %v1170, 4
        %v1174 = vsel %vm1119, 0, %v1173
        %v1175 = vrot.slane %v1111, 4
        %v1176 = vsel %vm1119, %v1175, %v1103
        %v1178 = vunpack.c.l.s4 1983009808
        %v1179 = vunpack.c.0.s8 %v1178
        %v1180 = vperm.slane %v1176, %v1179
        %v1181 = vrot.slane %v1115, 4
        %v1182 = vsel %vm1119, %v1181, %v1107
        %v1184 = vunpack.c.l.s4 1983009808
        %v1185 = vunpack.c.0.s8 %v1184
        %v1186 = vperm.slane %v1182, %v1185
        %v1187 = vrot.slane %v1186, 4
        %v1188 = vsel %vm1119, %v1187, %v1180
        %v1190 = vunpack.c.l.s4 1934713408
        %v1191 = vunpack.c.0.s8 %v1190
        %v1192 = vperm.slane %v1188, %v1191
        %v1193 = vrot.slane %v1192, 4
        %v1194 = vsel %vm1119, 0, %v1193
        %v1195 = vrot.slane %v1113, 4
        %v1196 = vsel %vm1119, %v1195, %v1105
        %v1198 = vunpack.c.l.s4 1983009808
        %v1199 = vunpack.c.0.s8 %v1198
        %v1200 = vperm.slane %v1196, %v1199
        %v1201 = vrot.slane %v1117, 4
        %v1202 = vsel %vm1119, %v1201, %v1109
        %v1204 = vunpack.c.l.s4 1983009808
        %v1205 = vunpack.c.0.s8 %v1204
        %v1206 = vperm.slane %v1202, %v1205
        %v1207 = vrot.slane %v1206, 4
        %v1208 = vsel %vm1119, %v1207, %v1200
        %v1210 = vunpack.c.l.s4 1934713408
        %v1211 = vunpack.c.0.s8 %v1210
        %v1212 = vperm.slane %v1208, %v1211
        %v1213 = vrot.slane %v1212, 4
        %v1214 = vsel %vm1119, 0, %v1213
        %v1217 = vpack.i.b16 %v1166, %v1138
        %v1218 = vshrl.u32 %v1138, 16
        %v1219 = vshrl.u32 %v1166, 16
        %v1220 = vpack.i.b16 %v1219, %v1218
        %v1223 = vpack.i.b16 %v1172, %v1144
        %v1224 = vshrl.u32 %v1144, 16
        %v1225 = vshrl.u32 %v1172, 16
        %v1226 = vpack.i.b16 %v1225, %v1224
        %v1229 = vpack.i.b16 %v1170, %v1142
        %v1230 = vshrl.u32 %v1142, 16
        %v1231 = vshrl.u32 %v1170, 16
        %v1232 = vpack.i.b16 %v1231, %v1230
        %v1235 = vpack.i.b16 %v1174, %v1146
        %v1236 = vshrl.u32 %v1146, 16
        %v1237 = vshrl.u32 %v1174, 16
        %v1238 = vpack.i.b16 %v1237, %v1236
        %v1241 = vpack.i.b16 %v1212, %v1192
        %v1242 = vshrl.u32 %v1192, 16
        %v1243 = vshrl.u32 %v1212, 16
        %v1244 = vpack.i.b16 %v1243, %v1242
        %v1247 = vpack.i.b16 %v1214, %v1194
        %v1248 = vshrl.u32 %v1194, 16
        %v1249 = vshrl.u32 %v1214, 16
        %v1250 = vpack.i.b16 %v1249, %v1248
        %vm1251 = vcmask 64512
        %v1253 = vsel %vm1251, %v1217, 0
        %v1256 = vsel %vm1251, %v1229, 0
        %1258 = vmatpush.bf16.xpose.msra.mxu0 0
        %1259 = vmatpush.bf16.xpose.msra.mxu0 0
        %1260 = vmatpush.bf16.xpose.msra.mxu0 0
        %1261 = vmatpush.bf16.xpose.msra.mxu0 0
        %1262 = vmatpush.bf16.xpose.msra.mxu0 0
        %1263 = vmatpush.bf16.xpose.msra.mxu0 0
        %1264 = vmatpush.bf16.xpose.msra.mxu0 0
        %1265 = vmatpush.bf16.xpose.msra.mxu0 %v1256
        %1266 = vmatmul.bf16.gmra.mxu0 %v1253
        %v1267 = vpop.f32.mrf.mxu0
        %v1268 = vadd.f32 0.0, %v1267
        %v1269 = vpop.f32.mrf.mxu0
        %1270 = vdwg.mxu0
        %v1272 = vsel %vm1251, %v1220, 0
        %v1275 = vsel %vm1251, %v1232, 0
        %1277 = vmatpush.bf16.xpose.msra.mxu0 0
        %1278 = vmatpush.bf16.xpose.msra.mxu0 0
        %1279 = vmatpush.bf16.xpose.msra.mxu0 0
        %1280 = vmatpush.bf16.xpose.msra.mxu0 0
        %1281 = vmatpush.bf16.xpose.msra.mxu0 0
        %1282 = vmatpush.bf16.xpose.msra.mxu0 0
        %1283 = vmatpush.bf16.xpose.msra.mxu0 0
        %1284 = vmatpush.bf16.xpose.msra.mxu0 %v1275
        %1285 = vmatmul.bf16.gmra.mxu0 %v1272
        %v1286 = vpop.f32.mrf.mxu0
        %v1287 = vadd.f32 0.0, %v1286
        %v1288 = vpop.f32.mrf.mxu0
        %1289 = vdwg.mxu0
        %v1291 = vsel %vm1251, %v1223, 0
        %v1294 = vsel %vm1251, %v1235, 0
        %1296 = vmatpush.bf16.xpose.msra.mxu0 0
        %1297 = vmatpush.bf16.xpose.msra.mxu0 0
        %1298 = vmatpush.bf16.xpose.msra.mxu0 0
        %1299 = vmatpush.bf16.xpose.msra.mxu0 0
        %1300 = vmatpush.bf16.xpose.msra.mxu0 0
        %1301 = vmatpush.bf16.xpose.msra.mxu0 0
        %1302 = vmatpush.bf16.xpose.msra.mxu0 0
        %1303 = vmatpush.bf16.xpose.msra.mxu0 %v1294
        %1304 = vmatmul.bf16.gmra.mxu0 %v1291
        %v1305 = vpop.f32.mrf.mxu0
        %v1306 = vadd.f32 0.0, %v1305
        %v1307 = vpop.f32.mrf.mxu0
        %1308 = vdwg.mxu0
        %v1310 = vsel %vm1251, %v1226, 0
        %v1313 = vsel %vm1251, %v1238, 0
        %1315 = vmatpush.bf16.xpose.msra.mxu0 0
        %1316 = vmatpush.bf16.xpose.msra.mxu0 0
        %1317 = vmatpush.bf16.xpose.msra.mxu0 0
        %1318 = vmatpush.bf16.xpose.msra.mxu0 0
        %1319 = vmatpush.bf16.xpose.msra.mxu0 0
        %1320 = vmatpush.bf16.xpose.msra.mxu0 0
        %1321 = vmatpush.bf16.xpose.msra.mxu0 0
        %1322 = vmatpush.bf16.xpose.msra.mxu0 %v1313
        %1323 = vmatmul.bf16.gmra.mxu0 %v1310
        %v1324 = vpop.f32.mrf.mxu0
        %v1325 = vadd.f32 0.0, %v1324
        %v1326 = vpop.f32.mrf.mxu0
        %1327 = vdwg.mxu0
        %v1328 = vld [vmem:[%s684] sm:$0x1]
        %v1330 = vperm.slane %v1328, 0
        %v1332 = vadd.f32 %v1268, %v1330
        %v1333 = vadd.f32 %v1287, %v1330
        %v1334 = vadd.f32 %v1306, %v1330
        %v1335 = vadd.f32 %v1325, %v1330
        %v1336 = vsel %vm1251, %v1332, -inf
        %1337 = vmax.xlane.f32.xlu0 %v1336
        %v1338 = vpop.xlane.xlu0 %1337
        %v1339 = vsel %vm1251, %v1333, -inf
        %1340 = vmax.xlane.f32.xlu0 %v1339
        %v1341 = vpop.xlane.xlu0 %1340
        %v1342 = vsel %vm1251, %v1334, -inf
        %1343 = vmax.xlane.f32.xlu0 %v1342
        %v1344 = vpop.xlane.xlu0 %1343
        %v1345 = vsel %vm1251, %v1335, -inf
        %1346 = vmax.xlane.f32.xlu0 %v1345
        %v1347 = vpop.xlane.xlu0 %1346
        %v1348 = vsub.f32 %v1332, %v1338
        %v1349 = vsub.f32 %v1333, %v1341
        %v1350 = vsub.f32 %v1334, %v1344
        %v1351 = vsub.f32 %v1335, %v1347
        %v1352 = vmul.f32 %v1348, 1.442695
        %v1353 = vpow.pop %v1352
        %v1354 = vmul.f32 %v1349, 1.442695
        %v1355 = vpow.pop %v1354
        %v1356 = vmul.f32 %v1350, 1.442695
        %v1357 = vpow.pop %v1356
        %v1358 = vmul.f32 %v1351, 1.442695
        %v1359 = vpow.pop %v1358
        %v1360 = vsel %vm1251, %v1353, 0.0
        %1361 = vadd.xlane.f32.xlu0 %v1360
        %v1362 = vpop.xlane.xlu0 %1361
        %v1363 = vsel %vm1251, %v1355, 0.0
        %1364 = vadd.xlane.f32.xlu0 %v1363
        %v1365 = vpop.xlane.xlu0 %1364
        %v1366 = vsel %vm1251, %v1357, 0.0
        %1367 = vadd.xlane.f32.xlu0 %v1366
        %v1368 = vpop.xlane.xlu0 %1367
        %v1369 = vsel %vm1251, %v1359, 0.0
        %1370 = vadd.xlane.f32.xlu0 %v1369
        %v1371 = vpop.xlane.xlu0 %1370
        %v1372 = vrcp.pop %v1362
        %v1373 = vrcp.pop %v1365
        %v1374 = vrcp.pop %v1368
        %v1375 = vrcp.pop %v1371
        %v1376 = vmul.f32 %v1353, %v1372
        %v1377 = vmul.f32 %v1355, %v1373
        %v1378 = vmul.f32 %v1357, %v1374
        %v1379 = vmul.f32 %v1359, %v1375
        %v1380 = vpack.c.bf16 %v1376, %v1376
        %v1381 = vpack.c.bf16 %v1377, %v1377
        %v1382 = vpack.c.bf16 %v1378, %v1378
        %v1383 = vpack.c.bf16 %v1379, %v1379
        %v1385 = vsel %vm1251, %v1380, 0
        %vm1387 = vcmask 1043456
        %v1389 = vsel %vm1387, %v1241, 0
        %1391 = vmatpush.bf16.msra.mxu0 0
        %1392 = vmatpush.bf16.msra.mxu0 0
        %1393 = vmatpush.bf16.msra.mxu0 0
        %1394 = vmatpush.bf16.msra.mxu0 0
        %1395 = vmatpush.bf16.msra.mxu0 0
        %1396 = vmatpush.bf16.msra.mxu0 0
        %1397 = vmatpush.bf16.msra.mxu0 0
        %1398 = vmatpush.bf16.msra.mxu0 %v1389
        %1399 = vmatmul.bf16.gmra.mxu0 %v1385
        %v1400 = vpop.f32.mrf.mxu0
        %v1401 = vadd.f32 0.0, %v1400
        %v1402 = vpop.f32.mrf.mxu0
        %1403 = vdwg.mxu0
        %v1405 = vsel %vm1251, %v1381, 0
        %v1408 = vsel %vm1387, %v1244, 0
        %1410 = vmatpush.bf16.msra.mxu0 0
        %1411 = vmatpush.bf16.msra.mxu0 0
        %1412 = vmatpush.bf16.msra.mxu0 0
        %1413 = vmatpush.bf16.msra.mxu0 0
        %1414 = vmatpush.bf16.msra.mxu0 0
        %1415 = vmatpush.bf16.msra.mxu0 0
        %1416 = vmatpush.bf16.msra.mxu0 0
        %1417 = vmatpush.bf16.msra.mxu0 %v1408
        %1418 = vmatmul.bf16.gmra.mxu0 %v1405
        %v1419 = vpop.f32.mrf.mxu0
        %v1420 = vadd.f32 0.0, %v1419
        %v1421 = vpop.f32.mrf.mxu0
        %1422 = vdwg.mxu0
        %v1424 = vsel %vm1251, %v1382, 0
        %v1427 = vsel %vm1387, %v1247, 0
        %1429 = vmatpush.bf16.msra.mxu0 0
        %1430 = vmatpush.bf16.msra.mxu0 0
        %1431 = vmatpush.bf16.msra.mxu0 0
        %1432 = vmatpush.bf16.msra.mxu0 0
        %1433 = vmatpush.bf16.msra.mxu0 0
        %1434 = vmatpush.bf16.msra.mxu0 0
        %1435 = vmatpush.bf16.msra.mxu0 0
        %1436 = vmatpush.bf16.msra.mxu0 %v1427
        %1437 = vmatmul.bf16.gmra.mxu0 %v1424
        %v1438 = vpop.f32.mrf.mxu0
        %v1439 = vadd.f32 0.0, %v1438
        %v1440 = vpop.f32.mrf.mxu0
        %1441 = vdwg.mxu0
        %v1443 = vsel %vm1251, %v1383, 0
        %v1446 = vsel %vm1387, %v1250, 0
        %1448 = vmatpush.bf16.msra.mxu0 0
        %1449 = vmatpush.bf16.msra.mxu0 0
        %1450 = vmatpush.bf16.msra.mxu0 0
        %1451 = vmatpush.bf16.msra.mxu0 0
        %1452 = vmatpush.bf16.msra.mxu0 0
        %1453 = vmatpush.bf16.msra.mxu0 0
        %1454 = vmatpush.bf16.msra.mxu0 0
        %1455 = vmatpush.bf16.msra.mxu0 %v1446
        %1456 = vmatmul.bf16.gmra.mxu0 %v1443
        %v1457 = vpop.f32.mrf.mxu0
        %v1458 = vadd.f32 0.0, %v1457
        %v1459 = vpop.f32.mrf.mxu0
        %1460 = vdwg.mxu0
        %v1461 = vpack.c.bf16 %v1401, %v1401
        %v1462 = vpack.c.bf16 %v1420, %v1420
        %v1463 = vpack.c.bf16 %v1439, %v1439
        %v1464 = vpack.c.bf16 %v1458, %v1458
        %v1467 = vpack.i.b16 %v1462, %v1461
        %v1468 = vshrl.u32 %v1461, 16
        %v1469 = vshrl.u32 %v1462, 16
        %v1470 = vpack.i.b16 %v1469, %v1468
        %v1473 = vpack.i.b16 %v1464, %v1463
        %v1474 = vshrl.u32 %v1463, 16
        %v1475 = vshrl.u32 %v1464, 16
        %v1476 = vpack.i.b16 %v1475, %v1474
        %v1479 = vunpack.c.l.s4 1983009808
        %v1480 = vunpack.c.0.s8 %v1479
        %v1481 = vperm.slane %v1467, %v1480
        %v1484 = vunpack.c.l.s4 1983009808
        %v1485 = vunpack.c.0.s8 %v1484
        %v1486 = vperm.slane %v1473, %v1485
        %v1487 = vrot.slane %v1486, 4
        %v1488 = vsel %vm1119, %v1487, %v1481
        %v1489 = vrot.slane %v1481, 4
        %v1490 = vsel %vm1119, %v1486, %v1489
        %v1492 = vunpack.c.l.s4 1934713408
        %v1493 = vunpack.c.0.s8 %v1492
        %v1494 = vperm.slane %v1488, %v1493
        %v1496 = vunpack.c.l.s4 1934713408
        %v1497 = vunpack.c.0.s8 %v1496
        %v1498 = vperm.slane %v1490, %v1497
        %v1499 = vrot.slane %v1494, 4
        %v1500 = vsel %vm1119, 0, %v1499
        %v1501 = vrot.slane %v1498, 4
        %v1502 = vsel %vm1119, 0, %v1501
        %v1505 = vunpack.c.l.s4 1983009808
        %v1506 = vunpack.c.0.s8 %v1505
        %v1507 = vperm.slane %v1470, %v1506
        %v1510 = vunpack.c.l.s4 1983009808
        %v1511 = vunpack.c.0.s8 %v1510
        %v1512 = vperm.slane %v1476, %v1511
        %v1513 = vrot.slane %v1512, 4
        %v1514 = vsel %vm1119, %v1513, %v1507
        %v1515 = vrot.slane %v1507, 4
        %v1516 = vsel %vm1119, %v1512, %v1515
        %v1518 = vunpack.c.l.s4 1934713408
        %v1519 = vunpack.c.0.s8 %v1518
        %v1520 = vperm.slane %v1514, %v1519
        %v1522 = vunpack.c.l.s4 1934713408
        %v1523 = vunpack.c.0.s8 %v1522
        %v1524 = vperm.slane %v1516, %v1523
        %v1525 = vrot.slane %v1520, 4
        %v1526 = vsel %vm1119, 0, %v1525
        %v1527 = vrot.slane %v1524, 4
        %v1528 = vsel %vm1119, 0, %v1527
        %v1529 = vsel %vm1119, %v1501, %v1494
        %v1531 = vunpack.c.l.s4 1983009808
        %v1532 = vunpack.c.0.s8 %v1531
        %v1533 = vperm.slane %v1529, %v1532
        %v1534 = vrot.slane %v1502, 4
        %v1535 = vsel %vm1119, %v1534, %v1500
        %v1537 = vunpack.c.l.s4 1983009808
        %v1538 = vunpack.c.0.s8 %v1537
        %v1539 = vperm.slane %v1535, %v1538
        %v1540 = vrot.slane %v1539, 4
        %v1541 = vsel %vm1119, %v1540, %v1533
        %v1543 = vunpack.c.l.s4 1934713408
        %v1544 = vunpack.c.0.s8 %v1543
        %v1545 = vperm.slane %v1541, %v1544
        %v1546 = vrot.slane %v1545, 4
        %v1547 = vsel %vm1119, 0, %v1546
        %v1548 = vsel %vm1119, %v1527, %v1520
        %v1550 = vunpack.c.l.s4 1983009808
        %v1551 = vunpack.c.0.s8 %v1550
        %v1552 = vperm.slane %v1548, %v1551
        %v1553 = vrot.slane %v1528, 4
        %v1554 = vsel %vm1119, %v1553, %v1526
        %v1556 = vunpack.c.l.s4 1983009808
        %v1557 = vunpack.c.0.s8 %v1556
        %v1558 = vperm.slane %v1554, %v1557
        %v1559 = vrot.slane %v1558, 4
        %v1560 = vsel %vm1119, %v1559, %v1552
        %v1562 = vunpack.c.l.s4 1934713408
        %v1563 = vunpack.c.0.s8 %v1562
        %v1564 = vperm.slane %v1560, %v1563
        %v1565 = vrot.slane %v1564, 4
        %v1566 = vsel %vm1119, 0, %v1565
        %v1569 = vpack.i.b16 %v1564, %v1545
        %v1570 = vshrl.u32 %v1545, 16
        %v1571 = vshrl.u32 %v1564, 16
        %v1572 = vpack.i.b16 %v1571, %v1570
        %v1575 = vpack.i.b16 %v1566, %v1547
        %v1576 = vshrl.u32 %v1547, 16
        %v1577 = vshrl.u32 %v1566, 16
        %v1578 = vpack.i.b16 %v1577, %v1576
        %v1579 = vunpack.c.l.b16 %v1572
        %v1580 = vpack.c.b16 %v1579, %v1579
        %1581 = vrot.lane.b32.xlu0 %v1580, 8
        %v1582 = vpop.permute.xlu0 %1581
        %v1583 = vunpack.c.l.b16 %v1575
        %v1584 = vpack.c.b16 %v1583, %v1583
        %1585 = vrot.lane.b32.xlu0 %v1584, 16
        %v1586 = vpop.permute.xlu0 %1585
        %v1587 = vunpack.c.l.b16 %v1578
        %v1588 = vpack.c.b16 %v1587, %v1587
        %1589 = vrot.lane.b32.xlu0 %v1588, 24
        %v1590 = vpop.permute.xlu0 %1589
        %v1593 = vsel %vm1251, %v1569, %v1582
        %vm1594 = vcmask 130048
        %v1596 = vsel %vm1594, %v1593, %v1586
        %vm1597 = vcmask 195584
        %v1599 = vsel %vm1597, %v1596, %v1590
        %v1600 = vld [vmem:[%s826] sm:$0xf]
        %v1601 = vld [vmem:[%s826 + $0x4] sm:$0xf]
        %v1602 = vld [vmem:[%s826 + $0x8] sm:$0xf]
        %v1603 = vld [vmem:[%s826 + $0xc] sm:$0xf]
        %v1604 = vld [vmem:[%s829] sm:$0x1]
        %v1606 = vperm.slane %v1604, 0
        %v1612 = vunpack.c.l.b16 %v1600
        %v1613 = vunpack.c.l.b16 %v1601
        %v1614 = vunpack.c.l.b16 %v1602
        %v1615 = vunpack.c.l.b16 %v1603
        %v1616 = vpack.c.b16 %v1613, %v1612
        %v1617 = vpack.c.b16 %v1615, %v1614
        %v1620 = vsel %vm882, %v1599, 0
        %1622 = vmatpush.bf16.msra.mxu0 0
        %1623 = vmatpush.bf16.msra.mxu0 0
        %1624 = vmatpush.bf16.msra.mxu0 0
        %1625 = vmatpush.bf16.msra.mxu0 0
        %1626 = vmatpush.bf16.msra.mxu0 0
        %1627 = vmatpush.bf16.msra.mxu0 0
        %1628 = vmatpush.bf16.msra.mxu0 %v1617
        %1629 = vmatpush.bf16.msra.mxu0 %v1616
        %1630 = vmatmul.bf16.gmra.mxu0 %v1620
        %v1631 = vpop.f32.mrf.mxu0
        %v1632 = vadd.f32 %v1606, %v1631
        %v1633 = vpop.f32.mrf.mxu0
        %1634 = vdwg.mxu0
        %v1635 = vadd.f32 %v860, %v1632
        %v1636 = vld [vmem:[%s832] sm:$0x1]
        %v1637 = vld [vmem:[%s702] sm:$0x1]
        %v1638 = vsel %vm882, %v1635, 0.0
        %1639 = vadd.xlane.f32.xlu0 %v1638
        %v1640 = vpop.xlane.xlu0 %1639
        %v1641 = vrcp.pop 32.0
        %v1642 = vmul.f32 32.0, %v1641
        %v1643 = vsub.f32 1.0, %v1642
        %v1644 = vmul.f32 %v1641, %v1643
        %v1645 = vadd.f32 %v1641, %v1644
        %vm1646 = vweird.f32 %v1641
        %v1647 = vsel %vm1646, %v1641, %v1645
        %v1648 = vmul.f32 %v1640, %v1647
        %v1649 = vsub.f32 %v1635, %v1648
        %v1650 = vmul.f32 %v1649, %v1649
        %v1651 = vsel %vm882, %v1650, 0.0
        %1652 = vadd.xlane.f32.xlu0 %v1651
        %v1653 = vpop.xlane.xlu0 %1652
        %v1654 = vmul.f32 %v1653, %v1647
        %v1655 = vadd.f32 %v1654, 1e-05
        %v1656 = vrsqrt.pop %v1655
        %v1657 = vmul.f32 %v1656, %v1655
        %v1658 = vmul.f32 %v1657, %v1656
        %v1659 = vmul.f32 0.5, %v1658
        %v1660 = vsub.f32 1.5, %v1659
        %v1661 = vmul.f32 %v1656, %v1660
        %vm1662 = vweird.f32 %v1655
        %vm1663 = vweird.f32 %v1656
        %vm1664 = vmor %vm1662, %vm1663
        %v1665 = vsel %vm1664, %v1656, %v1661
        %v1666 = vmul.f32 %v1649, %v1665
        %v1668 = vperm.slane %v1636, 0
        %v1670 = vmul.f32 %v1666, %v1668
        %v1672 = vperm.slane %v1637, 0
        %v1674 = vadd.f32 %v1670, %v1672
        %v1675 = vpack.c.bf16 %v1674, %v1674
        %v1676 = vld [vmem:[%s837] sm:$0xf]
        %v1677 = vld [vmem:[%s837 + $0x4] sm:$0xf]
        %v1678 = vld [vmem:[%s837 + $0x8] sm:$0xf]
        %v1679 = vld [vmem:[%s837 + $0xc] sm:$0xf]
        %v1680 = vld [vmem:[%s840] sm:$0x1]
        %v1682 = vperm.slane %v1680, 0
        %v1688 = vunpack.c.l.b16 %v1676
        %v1689 = vunpack.c.l.b16 %v1677
        %v1690 = vunpack.c.l.b16 %v1678
        %v1691 = vunpack.c.l.b16 %v1679
        %v1692 = vpack.c.b16 %v1689, %v1688
        %v1693 = vpack.c.b16 %v1691, %v1690
        %v1697 = vsel %vm882, %v1675, 0
        %1699 = vmatpush.bf16.msra.mxu0 0
        %1700 = vmatpush.bf16.msra.mxu0 0
        %1701 = vmatpush.bf16.msra.mxu0 0
        %1702 = vmatpush.bf16.msra.mxu0 0
        %1703 = vmatpush.bf16.msra.mxu0 0
        %1704 = vmatpush.bf16.msra.mxu0 0
        %1705 = vmatpush.bf16.msra.mxu0 %v1693
        %1706 = vmatpush.bf16.msra.mxu0 %v1692
        %1707 = vmatmul.bf16.gmra.mxu0 %v1697
        %v1708 = vpop.f32.mrf.mxu0
        %v1709 = vadd.f32 %v1682, %v1708
        %v1710 = vpop.f32.mrf.mxu0
        %1711 = vdwg.mxu0
        %v1712 = vmax.f32 %v1709, 0.0
        %v1713 = vpack.c.bf16 %v1712, %v1712
        %v1714 = vld [vmem:[%s845] sm:$0xf]
        %v1715 = vld [vmem:[%s845 + $0x4] sm:$0xf]
        %v1716 = vld [vmem:[%s845 + $0x8] sm:$0xf]
        %v1717 = vld [vmem:[%s845 + $0xc] sm:$0xf]
        %v1718 = vld [vmem:[%s845 + $0x10] sm:$0xf]
        %v1719 = vld [vmem:[%s845 + $0x14] sm:$0xf]
        %v1720 = vld [vmem:[%s845 + $0x18] sm:$0xf]
        %v1721 = vld [vmem:[%s845 + $0x1c] sm:$0xf]
        %v1722 = vld [vmem:[%s848] sm:$0x1]
        %v1724 = vperm.slane %v1722, 0
        %v1734 = vunpack.c.l.b16 %v1714
        %v1735 = vunpack.c.l.b16 %v1715
        %v1736 = vunpack.c.l.b16 %v1716
        %v1737 = vunpack.c.l.b16 %v1717
        %v1738 = vunpack.c.l.b16 %v1718
        %v1739 = vunpack.c.l.b16 %v1719
        %v1740 = vunpack.c.l.b16 %v1720
        %v1741 = vunpack.c.l.b16 %v1721
        %v1742 = vpack.c.b16 %v1735, %v1734
        %v1743 = vpack.c.b16 %v1737, %v1736
        %v1744 = vpack.c.b16 %v1739, %v1738
        %v1745 = vpack.c.b16 %v1741, %v1740
        %vm1750 = vcmask 523264
        %v1752 = vsel %vm1750, %v1713, 0
        %1754 = vmatpush.bf16.msra.mxu0 0
        %1755 = vmatpush.bf16.msra.mxu0 0
        %1756 = vmatpush.bf16.msra.mxu0 0
        %1757 = vmatpush.bf16.msra.mxu0 0
        %1758 = vmatpush.bf16.msra.mxu0 %v1745
        %1759 = vmatpush.bf16.msra.mxu0 %v1744
        %1760 = vmatpush.bf16.msra.mxu0 %v1743
        %1761 = vmatpush.bf16.msra.mxu0 %v1742
        %1762 = vmatmul.bf16.gmra.mxu0 %v1752
        %v1763 = vpop.f32.mrf.mxu0
        %v1764 = vadd.f32 %v1724, %v1763
        %v1765 = vpop.f32.mrf.mxu0
        %1766 = vdwg.mxu0
        %v1767 = vadd.f32 %v1674, %v1764
        %v1768 = vld [vmem:[%s851] sm:$0x1]
        %v1769 = vld [vmem:[%s711] sm:$0x1]
        %v1770 = vsel %vm882, %v1767, 0.0
        %1771 = vadd.xlane.f32.xlu0 %v1770
        %v1772 = vpop.xlane.xlu0 %1771
        %v1773 = vmul.f32 %v1772, %v1647
        %v1774 = vsub.f32 %v1767, %v1773
        %v1775 = vmul.f32 %v1774, %v1774
        %v1776 = vsel %vm882, %v1775, 0.0
        %1777 = vadd.xlane.f32.xlu0 %v1776
        %v1778 = vpop.xlane.xlu0 %1777
        %v1779 = vmul.f32 %v1778, %v1647
        %v1780 = vadd.f32 %v1779, 1e-05
        %v1781 = vrsqrt.pop %v1780
        %v1782 = vmul.f32 %v1781, %v1780
        %v1783 = vmul.f32 %v1782, %v1781
        %v1784 = vmul.f32 0.5, %v1783
        %v1785 = vsub.f32 1.5, %v1784
        %v1786 = vmul.f32 %v1781, %v1785
        %vm1787 = vweird.f32 %v1780
        %vm1788 = vweird.f32 %v1781
        %vm1789 = vmor %vm1787, %vm1788
        %v1790 = vsel %vm1789, %v1781, %v1786
        %v1791 = vmul.f32 %v1774, %v1790
        %v1793 = vperm.slane %v1768, 0
        %v1795 = vmul.f32 %v1791, %v1793
        %v1797 = vperm.slane %v1769, 0
        %v1799 = vadd.f32 %v1795, %v1797
        %p1800 = scmp.lt.s32.totalorder %s45, 1
        // Predicated region
        $region113: #{tpu_custom_call.1} parent=83 // pred_check
          %p1801 = pneg %p1800
        $region114: #{tpu_custom_call.1} parent=83 // pred_check_branch
          %1803 = sbr.rel (%p1801) target = $region116
        $region115: #{tpu_custom_call.1} parent=83 // pred_region
          %1804 = vst.msk [vmem:[#allocation2] sm:$0xff] %vm882, %v1799
        $region116: #{tpu_custom_call.1} parent=83 // pred_fallthru
          _
        %p1805 = scmp.eq.s32.totalorder %s45, 1
        // Predicated region
        $region117: #{tpu_custom_call.1} parent=83 // pred_check
          %p1806 = pneg %p1805
        $region118: #{tpu_custom_call.1} parent=83 // pred_check_branch
          %1808 = sbr.rel (%p1806) target = $region120
        $region119: #{tpu_custom_call.1} parent=83 // pred_region
          %v1809 = vpack.c.bf16 %v1799, %v1799
          %v1810 = vld [vmem:[#allocation12] sm:$0xf]
          %v1811 = vld [vmem:[#allocation12 + $0x4] sm:$0xf]
          %v1812 = vld [vmem:[#allocation12 + $0x8] sm:$0xf]
          %v1813 = vld [vmem:[#allocation12 + $0xc] sm:$0xf]
          %v1814 = vld [vmem:[%s15] sm:$0x1]
          %v1816 = vperm.slane %v1814, 0
          %v1822 = vunpack.c.l.b16 %v1810
          %v1823 = vunpack.c.l.b16 %v1811
          %v1824 = vunpack.c.l.b16 %v1812
          %v1825 = vunpack.c.l.b16 %v1813
          %v1826 = vpack.c.b16 %v1823, %v1822
          %v1827 = vpack.c.b16 %v1825, %v1824
          %v1831 = vsel %vm882, %v1809, 0
          %1833 = vmatpush.bf16.msra.mxu0 0
          %1834 = vmatpush.bf16.msra.mxu0 0
          %1835 = vmatpush.bf16.msra.mxu0 0
          %1836 = vmatpush.bf16.msra.mxu0 0
          %1837 = vmatpush.bf16.msra.mxu0 0
          %1838 = vmatpush.bf16.msra.mxu0 0
          %1839 = vmatpush.bf16.msra.mxu0 %v1827
          %1840 = vmatpush.bf16.msra.mxu0 %v1826
          %1841 = vmatmul.bf16.gmra.mxu0 %v1831
          %v1842 = vpop.f32.mrf.mxu0
          %v1843 = vadd.f32 %v1816, %v1842
          %v1844 = vpop.f32.mrf.mxu0
          %1845 = vdwg.mxu0
          %1846 = vst.msk [vmem:[%s816] sm:$0xff] %vm882, %v1843
        $region120: #{tpu_custom_call.1} parent=83 // pred_fallthru
          _
        %s1847 = sand.u32 %s466, 1
        %s1848 = scalar_lea.sflag [#allocation5], %s1847
        %s1849 = sand.u32 %s466, 1
        %s1850 = smul.addr %s1849, 8
        %s1851 = scalar_lea.vmem [#allocation14], %s1850
        // Predicated region
        $region121: #{tpu_custom_call.1} parent=83 // pred_check
          %p1852 = pneg %p476
        $region122: #{tpu_custom_call.1} parent=83 // pred_check_branch
          %1854 = sbr.rel (%p1852) target = $region124
        $region123: #{tpu_custom_call.1} parent=83 // pred_region
          %1856 = vsyncadd %s1848, 0
          %s1857 = smul.addr %s44, 8
          %s1858 = scalar_lea.hbm %s16, %s1857
          %s1860 = sshll.u32 %s1851, 4
          %s1861 = int_to_ptr.vmem [resolvable:$true] %s1860
          %s1862 = sshll.u32 %s1858, 4
          %s1863 = int_to_ptr.hbm [resolvable:$true] %s1862
          %1865 = dma.vmem_to_hbm [thread:$0]  %s1861, 128, %s1863, %s1848
        $region124: #{tpu_custom_call.1} parent=83 // pred_fallthru
          _
      $region84: #{tpu_custom_call.1} parent=5 // pred_fallthru
        _
      %p1866 = scmp.le.s32.totalorder 2, %s35
      // Predicated region
      $region125: #{tpu_custom_call.1} parent=5 // pred_check
        %p1867 = pneg %p1866
      $region126: #{tpu_custom_call.1} parent=5 // pred_check_branch
        %1869 = sbr.rel (%p1867) target = $region128
      $region127: #{tpu_custom_call.1} parent=5 // pred_region
        %s1870 = ssub.s32 %s35, 2
        // Predicated region
        $region129: #{tpu_custom_call.1} parent=127 // pred_check
          %p1871 = pneg %p482
        $region130: #{tpu_custom_call.1} parent=127 // pred_check_branch
          %1873 = sbr.rel (%p1871) target = $region132
        $region131: #{tpu_custom_call.1} parent=127 // pred_region
          %s1874 = sand.u32 %s467, 1
          %s1875 = scalar_lea.sflag [#allocation5], %s1874
          %s1876 = sand.u32 %s467, 1
          %s1877 = smul.addr %s1876, 8
          %s1878 = scalar_lea.vmem [#allocation14], %s1877
          %1880 = dma.done %s1875, 128
        $region132: #{tpu_custom_call.1} parent=127 // pred_fallthru
          _
      $region128: #{tpu_custom_call.1} parent=5 // pred_fallthru
        _
    $region6: #{tpu_custom_call.1} parent=1 // loop_footer
      %s39 = sadd.s32 1, %s35
    $region7: #{tpu_custom_call.1} parent=1 // loop_footer_branch
      %34 = sbr.rel target = $region3
    $region8: #{tpu_custom_call.1} parent=1 // loop_exit
      _
    %1881 = vsyncpa [#allocation4], 1
    %s1882 = scalar_lea.sflag [#allocation4], 1
    %1883 = vsyncpa %s1882, 1
    %1884 = vsyncpa [#allocation7], 1
    %s1885 = scalar_lea.sflag [#allocation7], 1
    %1886 = vsyncpa %s1885, 1
    %1887 = vsyncpa [#allocation10], 1
    %s1888 = scalar_lea.sflag [#allocation10], 1
    %1889 = vsyncpa %s1888, 1
    %1890 = vsyncpa [#allocation13], 1
    %1891 = vsyncpa [#allocation5], 1
    %s1892 = scalar_lea.sflag [#allocation5], 1
    %1893 = vsyncpa %s1892, 1

</llo_original>
